<compile_context>
chip_gen: v7x
topology: tpu7x:2x2x1
jax: 0.10.0
libtpu: 0.0.40
codegen_flags: <defaults>
</compile_context>

<pallas_src>
import jax
import jax.numpy as jnp
import numpy as np
from jax.experimental import pallas as pl
from jax.experimental.pallas import tpu as pltpu


def _leaky_relu(x, slope=0.2):
    return jnp.where(x >= 0, x, slope * x)


def _conv1(x, w1t, b1):
    # x: (Cin, L); w1t: (ndf, Cin); b1: (ndf, 1) -> (ndf, L)
    # Cin is tiny (3-4): do it as VPU broadcast-FMAs instead of a K=4 MXU matmul.
    cin = x.shape[0]
    h = x[0:1, :] * w1t[:, 0:1]
    for c in range(1, cin):
        h = h + x[c:c + 1, :] * w1t[:, c:c + 1]
    return h + b1


def _stats_kernel(x_ref, w1t_ref, b1_ref, w2t_ref, sum_ref, sq_ref):
    """Pass A: accumulate per-channel sum and sum-of-squares of h2."""
    n = pl.program_id(0)
    t = pl.program_id(1)

    @pl.when((n == 0) & (t == 0))
    def _():
        sum_ref[...] = jnp.zeros_like(sum_ref)
        sq_ref[...] = jnp.zeros_like(sq_ref)

    x = x_ref[0]                                                   # (Cin, L)
    h1 = _leaky_relu(_conv1(x, w1t_ref[...], b1_ref[...]))         # (ndf, L)
    h2 = jnp.dot(w2t_ref[...], h1, preferred_element_type=jnp.float32)  # (C2, L)
    # Keep accumulators lane-wide; the final (cheap) lane reduction happens in
    # the wrapper, so no per-tile XLU reduce and no 1-wide stores.
    sum_ref[...] += h2
    sq_ref[...] += h2 * h2


def _apply_kernel(x_ref, w1t_ref, b1_ref, w2t_ref, scale_ref, shift_ref,
                  w3_ref, o_ref):
    """Pass B: recompute h1/h2, apply folded BN affine + LeakyReLU + conv3."""
    x = x_ref[0]                                                   # (Cin, L)
    h1 = _leaky_relu(_conv1(x, w1t_ref[...], b1_ref[...]))
    h2 = jnp.dot(w2t_ref[...], h1, preferred_element_type=jnp.float32)
    h2 = _leaky_relu(h2 * scale_ref[...] + shift_ref[...])
    # conv3: single output channel -> VPU multiply + sublane (XLU) reduce;
    # keeps the MXU free and the output store lane-dense.
    o_ref[0] = jnp.sum(h2 * w3_ref[...], axis=0, keepdims=True)    # (1, L)


def _pick_tile(hw, max_tile=2048):
    """Largest lane-tile that divides H*W; multiple of 128 when tiled."""
    if hw <= max_tile:
        return hw
    for l in range(max_tile - max_tile % 128, 127, -128):
        if hw % l == 0:
            return l
    return hw  # fall back: one full-row tile


def pixel_discriminator(x_nchw, params):
    """x_nchw: (N, Cin, H, W) float32 -> (N, 1, H, W) float32."""
    w1t, b1, w2t, gamma, beta, w3 = params
    N, Cin, H, W = x_nchw.shape
    HW = H * W
    M = N * HW
    ndf = w1t.shape[0]
    c2 = w2t.shape[0]
    L = _pick_tile(HW)
    grid = (N, HW // L)

    # Pure reshape (no data movement): channels-first, pixels on lanes.
    x = x_nchw.reshape(N, Cin, HW)

    const2 = lambda n, t: (0, 0)   # resident weights: DMA'd once

    # ---------------- pass A: batch statistics of h2 ----------------------
    sum_p, sq_p = pl.pallas_call(
        _stats_kernel,
        out_shape=(jax.ShapeDtypeStruct((c2, L), jnp.float32),
                   jax.ShapeDtypeStruct((c2, L), jnp.float32)),
        grid_spec=pltpu.PrefetchScalarGridSpec(
            num_scalar_prefetch=0,
            grid=grid,
            in_specs=[
                pl.BlockSpec((1, Cin, L), lambda n, t: (n, 0, t)),
                pl.BlockSpec((ndf, Cin), const2),
                pl.BlockSpec((ndf, 1), const2),
                pl.BlockSpec((c2, ndf), const2),
            ],
            out_specs=(pl.BlockSpec((c2, L), const2),
                       pl.BlockSpec((c2, L), const2)),
        ),
        compiler_params=pltpu.CompilerParams(
            dimension_semantics=("arbitrary", "arbitrary")),
    )(x, w1t, b1, w2t)

    # Tiny per-channel math in the wrapper (128 values).
    total = jnp.float32(M)
    mean = jnp.sum(sum_p, axis=1, keepdims=True) / total           # (c2, 1)
    var = jnp.sum(sq_p, axis=1, keepdims=True) / total - mean * mean
    inv_std = jax.lax.rsqrt(var + 1e-5)                            # PyTorch eps
    scale = gamma * inv_std                                        # (c2, 1)
    shift = beta - mean * scale                                    # (c2, 1)

    # ---------------- pass B: normalize + activate + conv3 ----------------
    out = pl.pallas_call(
        _apply_kernel,
        out_shape=jax.ShapeDtypeStruct((N, 1, HW), jnp.float32),
        grid_spec=pltpu.PrefetchScalarGridSpec(
            num_scalar_prefetch=0,
            grid=grid,
            in_specs=[
                pl.BlockSpec((1, Cin, L), lambda n, t: (n, 0, t)),
                pl.BlockSpec((ndf, Cin), const2),
                pl.BlockSpec((ndf, 1), const2),
                pl.BlockSpec((c2, ndf), const2),
                pl.BlockSpec((c2, 1), const2),
                pl.BlockSpec((c2, 1), const2),
                pl.BlockSpec((c2, 1), const2),
            ],
            out_specs=pl.BlockSpec((1, 1, L), lambda n, t: (n, 0, t)),
        ),
        compiler_params=pltpu.CompilerParams(
            dimension_semantics=("parallel", "parallel")),
    )(x, w1t, b1, w2t, scale, shift, w3)

    return out.reshape(N, 1, H, W)


def init_params(key, input_nc, ndf=64):
    """Deterministic synthetic params, stored in channels-first matmul layout."""
    k1, k2, k3, kb = jax.random.split(key, 4)
    c2 = 2 * ndf
    w1t = jax.random.normal(k1, (ndf, input_nc), jnp.float32) * 0.1   # conv1 (out, in)
    b1 = jax.random.normal(kb, (ndf, 1), jnp.float32) * 0.1
    w2t = jax.random.normal(k2, (c2, ndf), jnp.float32) * 0.05        # conv2 (out, in)
    gamma = jnp.ones((c2, 1), jnp.float32)                            # BatchNorm2d defaults
    beta = jnp.zeros((c2, 1), jnp.float32)
    w3 = jax.random.normal(k3, (c2, 1), jnp.float32) * 0.05           # conv3 (in, out=1)
    return (w1t, b1, w2t, gamma, beta, w3)


if __name__ == "__main__":
    key = jax.random.PRNGKey(0)
    kx, kp = jax.random.split(key)

    N, Cin, H, W = 2, 4, 16, 16
    ndf = 64
    x = jax.random.normal(kx, (N, Cin, H, W), jnp.float32)
    params = init_params(kp, Cin, ndf)

    out = jax.jit(pixel_discriminator)(x, params)
    out = jax.block_until_ready(out)
    assert out.shape == (N, 1, H, W), out.shape

    # float64 numpy reference of the same math (PyTorch training-mode BN:
    # batch stats, biased variance, eps=1e-5).
    w1t, b1, w2t, gamma, beta, w3 = [np.asarray(p, np.float64) for p in params]
    xn = np.asarray(x, np.float64)
    xr = xn.transpose(0, 2, 3, 1).reshape(-1, Cin)                 # (M, Cin)
    h = xr @ w1t.T + b1[:, 0]
    h = np.where(h >= 0, h, 0.2 * h)
    h2 = h @ w2t.T
    mu = h2.mean(0)
    var = h2.var(0)                                                # biased
    h2 = (h2 - mu) / np.sqrt(var + 1e-5) * gamma[:, 0] + beta[:, 0]
    h2 = np.where(h2 >= 0, h2, 0.2 * h2)
    ref = (h2 @ w3[:, 0]).reshape(N, H, W)[:, None, :, :]

    # Tolerance allows for the MXU's default reduced-precision f32 matmul path.
    err = float(np.abs(np.asarray(out) - ref).max())
    assert np.allclose(np.asarray(out), ref, atol=1e-2, rtol=1e-2), err

    print("KERNEL_OK")
</pallas_src>

<mosaic_0001>
module attributes {stable_mosaic.version = 11 : i64} {
  func.func @_stats_kernel(%arg0: i32, %arg1: i32, %arg2: memref<1x4x256xf32, #tpu.memory_space<vmem>>, %arg3: memref<64x4xf32, #tpu.memory_space<vmem>>, %arg4: memref<64x1xf32, #tpu.memory_space<vmem>>, %arg5: memref<128x64xf32, #tpu.memory_space<vmem>>, %arg6: memref<128x256xf32, #tpu.memory_space<vmem>>, %arg7: memref<128x256xf32, #tpu.memory_space<vmem>>) attributes {dimension_semantics = [#tpu.dimension_semantics<arbitrary>, #tpu.dimension_semantics<arbitrary>], iteration_bounds = array<i64: 2, 1>, scalar_prefetch = 0 : i64, scratch_operands = 0 : i64, tpu.core_type = #tpu.core_type<tc>, window_params = [{transform_indices = @transform_0, window_bounds = array<i64: 1, 4, 256>}, {pipeline_mode = #tpu.pipeline_mode<synchronous>, transform_indices = @transform_1, window_bounds = array<i64: 64, 4>}, {pipeline_mode = #tpu.pipeline_mode<synchronous>, transform_indices = @transform_2, window_bounds = array<i64: 64, 1>}, {pipeline_mode = #tpu.pipeline_mode<synchronous>, transform_indices = @transform_3, window_bounds = array<i64: 128, 64>}, {pipeline_mode = #tpu.pipeline_mode<synchronous>, transform_indices = @transform_4, window_bounds = array<i64: 128, 256>}, {pipeline_mode = #tpu.pipeline_mode<synchronous>, transform_indices = @transform_5, window_bounds = array<i64: 128, 256>}]} {
    %c0_i32 = arith.constant 0 : i32
    %0 = arith.cmpi eq, %arg0, %c0_i32 : i32
    %c0_i32_0 = arith.constant 0 : i32
    %1 = arith.cmpi eq, %arg1, %c0_i32_0 : i32
    %2 = arith.andi %0, %1 : i1
    %3 = arith.extui %2 : i1 to i32
    %c0_i32_1 = arith.constant 0 : i32
    %4 = arith.cmpi ne, %3, %c0_i32_1 : i32
    scf.if %4 {
      %cst_20 = arith.constant 0.000000e+00 : f32
      %48 = vector.broadcast %cst_20 : f32 to vector<128x256xf32>
      %c0_21 = arith.constant 0 : index
      %c0_22 = arith.constant 0 : index
      %49 = vector.load %arg6[%c0_21, %c0_22] : memref<128x256xf32, #tpu.memory_space<vmem>>, vector<128x256xf32>
      tpu.vector_store %arg6[%c0_21, %c0_22], %48 {strides = array<i32>} : memref<128x256xf32, #tpu.memory_space<vmem>>, vector<128x256xf32>,
      %cst_23 = arith.constant 0.000000e+00 : f32
      %50 = vector.broadcast %cst_23 : f32 to vector<128x256xf32>
      %c0_24 = arith.constant 0 : index
      %c0_25 = arith.constant 0 : index
      %51 = vector.load %arg7[%c0_24, %c0_25] : memref<128x256xf32, #tpu.memory_space<vmem>>, vector<128x256xf32>
      tpu.vector_store %arg7[%c0_24, %c0_25], %50 {strides = array<i32>} : memref<128x256xf32, #tpu.memory_space<vmem>>, vector<128x256xf32>,
    } else {
    }
    %c0 = arith.constant 0 : index
    %c0_2 = arith.constant 0 : index
    %c0_3 = arith.constant 0 : index
    %5 = vector.load %arg2[%c0, %c0_2, %c0_3] : memref<1x4x256xf32, #tpu.memory_space<vmem>>, vector<1x4x256xf32>
    %6 = vector.shape_cast %5 : vector<1x4x256xf32> to vector<4x256xf32>
    %c0_4 = arith.constant 0 : index
    %c0_5 = arith.constant 0 : index
    %7 = vector.load %arg3[%c0_4, %c0_5] : memref<64x4xf32, #tpu.memory_space<vmem>>, vector<64x4xf32>
    %c0_6 = arith.constant 0 : index
    %c0_7 = arith.constant 0 : index
    %8 = vector.load %arg4[%c0_6, %c0_7] : memref<64x1xf32, #tpu.memory_space<vmem>>, vector<64x1xf32>
    %9 = vector.extract_strided_slice %6 {offsets = [0, 0], sizes = [1, 256], strides = [1, 1]} : vector<4x256xf32> to vector<1x256xf32>
    %10 = vector.extract_strided_slice %7 {offsets = [0, 0], sizes = [64, 1], strides = [1, 1]} : vector<64x4xf32> to vector<64x1xf32>
    %11 = vector.broadcast %9 : vector<1x256xf32> to vector<64x256xf32>
    %12 = vector.broadcast %10 : vector<64x1xf32> to vector<64x256xf32>
    %13 = arith.mulf %11, %12 : vector<64x256xf32>
    %14 = vector.extract_strided_slice %6 {offsets = [1, 0], sizes = [1, 256], strides = [1, 1]} : vector<4x256xf32> to vector<1x256xf32>
    %15 = vector.extract_strided_slice %7 {offsets = [0, 1], sizes = [64, 1], strides = [1, 1]} : vector<64x4xf32> to vector<64x1xf32>
    %16 = vector.broadcast %14 : vector<1x256xf32> to vector<64x256xf32>
    %17 = vector.broadcast %15 : vector<64x1xf32> to vector<64x256xf32>
    %18 = arith.mulf %16, %17 : vector<64x256xf32>
    %19 = arith.addf %13, %18 : vector<64x256xf32>
    %20 = vector.extract_strided_slice %6 {offsets = [2, 0], sizes = [1, 256], strides = [1, 1]} : vector<4x256xf32> to vector<1x256xf32>
    %21 = vector.extract_strided_slice %7 {offsets = [0, 2], sizes = [64, 1], strides = [1, 1]} : vector<64x4xf32> to vector<64x1xf32>
    %22 = vector.broadcast %20 : vector<1x256xf32> to vector<64x256xf32>
    %23 = vector.broadcast %21 : vector<64x1xf32> to vector<64x256xf32>
    %24 = arith.mulf %22, %23 : vector<64x256xf32>
    %25 = arith.addf %19, %24 : vector<64x256xf32>
    %26 = vector.extract_strided_slice %6 {offsets = [3, 0], sizes = [1, 256], strides = [1, 1]} : vector<4x256xf32> to vector<1x256xf32>
    %27 = vector.extract_strided_slice %7 {offsets = [0, 3], sizes = [64, 1], strides = [1, 1]} : vector<64x4xf32> to vector<64x1xf32>
    %28 = vector.broadcast %26 : vector<1x256xf32> to vector<64x256xf32>
    %29 = vector.broadcast %27 : vector<64x1xf32> to vector<64x256xf32>
    %30 = arith.mulf %28, %29 : vector<64x256xf32>
    %31 = arith.addf %25, %30 : vector<64x256xf32>
    %32 = vector.broadcast %8 : vector<64x1xf32> to vector<64x256xf32>
    %33 = arith.addf %31, %32 : vector<64x256xf32>
    %cst = arith.constant 0.000000e+00 : f32
    %34 = vector.broadcast %cst : f32 to vector<64x256xf32>
    %35 = arith.cmpf oge, %33, %34 : vector<64x256xf32>
    %cst_8 = arith.constant 2.000000e-01 : f32
    %36 = vector.broadcast %cst_8 : f32 to vector<64x256xf32>
    %37 = arith.mulf %36, %33 : vector<64x256xf32>
    %38 = arith.select %35, %33, %37 : vector<64x256xi1>, vector<64x256xf32>
    %c0_9 = arith.constant 0 : index
    %c0_10 = arith.constant 0 : index
    %39 = vector.load %arg5[%c0_9, %c0_10] : memref<128x64xf32, #tpu.memory_space<vmem>>, vector<128x64xf32>
    %cst_11 = arith.constant dense<0.000000e+00> : vector<128x256xf32>
    %40 = tpu.matmul %39, %38, %cst_11 {dimension_numbers = #tpu.dot_dimension_numbers<[1], [0], [0], [1], [0, 0, 1, 1], [], []>} : vector<128x64xf32>, vector<64x256xf32>, vector<128x256xf32> -> vector<128x256xf32>
    %c0_12 = arith.constant 0 : index
    %c0_13 = arith.constant 0 : index
    %41 = vector.load %arg6[%c0_12, %c0_13] : memref<128x256xf32, #tpu.memory_space<vmem>>, vector<128x256xf32>
    %42 = arith.addf %41, %40 : vector<128x256xf32>
    %c0_14 = arith.constant 0 : index
    %c0_15 = arith.constant 0 : index
    %43 = vector.load %arg6[%c0_14, %c0_15] : memref<128x256xf32, #tpu.memory_space<vmem>>, vector<128x256xf32>
    tpu.vector_store %arg6[%c0_14, %c0_15], %42 {strides = array<i32>} : memref<128x256xf32, #tpu.memory_space<vmem>>, vector<128x256xf32>,
    %c0_16 = arith.constant 0 : index
    %c0_17 = arith.constant 0 : index
    %44 = vector.load %arg7[%c0_16, %c0_17] : memref<128x256xf32, #tpu.memory_space<vmem>>, vector<128x256xf32>
    %45 = arith.mulf %40, %40 : vector<128x256xf32>
    %46 = arith.addf %44, %45 : vector<128x256xf32>
    %c0_18 = arith.constant 0 : index
    %c0_19 = arith.constant 0 : index
    %47 = vector.load %arg7[%c0_18, %c0_19] : memref<128x256xf32, #tpu.memory_space<vmem>>, vector<128x256xf32>
    tpu.vector_store %arg7[%c0_18, %c0_19], %46 {strides = array<i32>} : memref<128x256xf32, #tpu.memory_space<vmem>>, vector<128x256xf32>,
    return
  }
  func.func @transform_0(%arg0: i32, %arg1: i32) -> (i32, i32, i32) {
    %c0_i32 = arith.constant 0 : i32
    %c0_i32_0 = arith.constant 0 : i32
    return %arg0, %c0_i32, %arg1 : i32, i32, i32
  }
  func.func @transform_1(%arg0: i32, %arg1: i32) -> (i32, i32) {
    %c0_i32 = arith.constant 0 : i32
    %c0_i32_0 = arith.constant 0 : i32
    %c0_i32_1 = arith.constant 0 : i32
    return %c0_i32, %c0_i32_0 : i32, i32
  }
  func.func @transform_2(%arg0: i32, %arg1: i32) -> (i32, i32) {
    %c0_i32 = arith.constant 0 : i32
    %c0_i32_0 = arith.constant 0 : i32
    %c0_i32_1 = arith.constant 0 : i32
    return %c0_i32, %c0_i32_0 : i32, i32
  }
  func.func @transform_3(%arg0: i32, %arg1: i32) -> (i32, i32) {
    %c0_i32 = arith.constant 0 : i32
    %c0_i32_0 = arith.constant 0 : i32
    %c0_i32_1 = arith.constant 0 : i32
    return %c0_i32, %c0_i32_0 : i32, i32
  }
  func.func @transform_4(%arg0: i32, %arg1: i32) -> (i32, i32) {
    %c0_i32 = arith.constant 0 : i32
    %c0_i32_0 = arith.constant 0 : i32
    %c0_i32_1 = arith.constant 0 : i32
    return %c0_i32, %c0_i32_0 : i32, i32
  }
  func.func @transform_5(%arg0: i32, %arg1: i32) -> (i32, i32) {
    %c0_i32 = arith.constant 0 : i32
    %c0_i32_0 = arith.constant 0 : i32
    %c0_i32_1 = arith.constant 0 : i32
    return %c0_i32, %c0_i32_0 : i32, i32
  }
}

module attributes {stable_mosaic.version = 11 : i64} {
  func.func @_apply_kernel(%arg0: i32, %arg1: i32, %arg2: memref<1x4x256xf32, #tpu.memory_space<vmem>>, %arg3: memref<64x4xf32, #tpu.memory_space<vmem>>, %arg4: memref<64x1xf32, #tpu.memory_space<vmem>>, %arg5: memref<128x64xf32, #tpu.memory_space<vmem>>, %arg6: memref<128x1xf32, #tpu.memory_space<vmem>>, %arg7: memref<128x1xf32, #tpu.memory_space<vmem>>, %arg8: memref<128x1xf32, #tpu.memory_space<vmem>>, %arg9: memref<1x1x256xf32, #tpu.memory_space<vmem>>) attributes {dimension_semantics = [#tpu.dimension_semantics<parallel>, #tpu.dimension_semantics<parallel>], iteration_bounds = array<i64: 2, 1>, scalar_prefetch = 0 : i64, scratch_operands = 0 : i64, tpu.core_type = #tpu.core_type<tc>, window_params = [{transform_indices = @transform_0, window_bounds = array<i64: 1, 4, 256>}, {pipeline_mode = #tpu.pipeline_mode<synchronous>, transform_indices = @transform_1, window_bounds = array<i64: 64, 4>}, {pipeline_mode = #tpu.pipeline_mode<synchronous>, transform_indices = @transform_2, window_bounds = array<i64: 64, 1>}, {pipeline_mode = #tpu.pipeline_mode<synchronous>, transform_indices = @transform_3, window_bounds = array<i64: 128, 64>}, {pipeline_mode = #tpu.pipeline_mode<synchronous>, transform_indices = @transform_4, window_bounds = array<i64: 128, 1>}, {pipeline_mode = #tpu.pipeline_mode<synchronous>, transform_indices = @transform_5, window_bounds = array<i64: 128, 1>}, {pipeline_mode = #tpu.pipeline_mode<synchronous>, transform_indices = @transform_6, window_bounds = array<i64: 128, 1>}, {transform_indices = @transform_7, window_bounds = array<i64: 1, 1, 256>}]} {
    %c0 = arith.constant 0 : index
    %c0_0 = arith.constant 0 : index
    %c0_1 = arith.constant 0 : index
    %0 = vector.load %arg2[%c0, %c0_0, %c0_1] : memref<1x4x256xf32, #tpu.memory_space<vmem>>, vector<1x4x256xf32>
    %1 = vector.shape_cast %0 : vector<1x4x256xf32> to vector<4x256xf32>
    %c0_2 = arith.constant 0 : index
    %c0_3 = arith.constant 0 : index
    %2 = vector.load %arg3[%c0_2, %c0_3] : memref<64x4xf32, #tpu.memory_space<vmem>>, vector<64x4xf32>
    %c0_4 = arith.constant 0 : index
    %c0_5 = arith.constant 0 : index
    %3 = vector.load %arg4[%c0_4, %c0_5] : memref<64x1xf32, #tpu.memory_space<vmem>>, vector<64x1xf32>
    %4 = vector.extract_strided_slice %1 {offsets = [0, 0], sizes = [1, 256], strides = [1, 1]} : vector<4x256xf32> to vector<1x256xf32>
    %5 = vector.extract_strided_slice %2 {offsets = [0, 0], sizes = [64, 1], strides = [1, 1]} : vector<64x4xf32> to vector<64x1xf32>
    %6 = vector.broadcast %4 : vector<1x256xf32> to vector<64x256xf32>
    %7 = vector.broadcast %5 : vector<64x1xf32> to vector<64x256xf32>
    %8 = arith.mulf %6, %7 : vector<64x256xf32>
    %9 = vector.extract_strided_slice %1 {offsets = [1, 0], sizes = [1, 256], strides = [1, 1]} : vector<4x256xf32> to vector<1x256xf32>
    %10 = vector.extract_strided_slice %2 {offsets = [0, 1], sizes = [64, 1], strides = [1, 1]} : vector<64x4xf32> to vector<64x1xf32>
    %11 = vector.broadcast %9 : vector<1x256xf32> to vector<64x256xf32>
    %12 = vector.broadcast %10 : vector<64x1xf32> to vector<64x256xf32>
    %13 = arith.mulf %11, %12 : vector<64x256xf32>
    %14 = arith.addf %8, %13 : vector<64x256xf32>
    %15 = vector.extract_strided_slice %1 {offsets = [2, 0], sizes = [1, 256], strides = [1, 1]} : vector<4x256xf32> to vector<1x256xf32>
    %16 = vector.extract_strided_slice %2 {offsets = [0, 2], sizes = [64, 1], strides = [1, 1]} : vector<64x4xf32> to vector<64x1xf32>
    %17 = vector.broadcast %15 : vector<1x256xf32> to vector<64x256xf32>
    %18 = vector.broadcast %16 : vector<64x1xf32> to vector<64x256xf32>
    %19 = arith.mulf %17, %18 : vector<64x256xf32>
    %20 = arith.addf %14, %19 : vector<64x256xf32>
    %21 = vector.extract_strided_slice %1 {offsets = [3, 0], sizes = [1, 256], strides = [1, 1]} : vector<4x256xf32> to vector<1x256xf32>
    %22 = vector.extract_strided_slice %2 {offsets = [0, 3], sizes = [64, 1], strides = [1, 1]} : vector<64x4xf32> to vector<64x1xf32>
    %23 = vector.broadcast %21 : vector<1x256xf32> to vector<64x256xf32>
    %24 = vector.broadcast %22 : vector<64x1xf32> to vector<64x256xf32>
    %25 = arith.mulf %23, %24 : vector<64x256xf32>
    %26 = arith.addf %20, %25 : vector<64x256xf32>
    %27 = vector.broadcast %3 : vector<64x1xf32> to vector<64x256xf32>
    %28 = arith.addf %26, %27 : vector<64x256xf32>
    %cst = arith.constant 0.000000e+00 : f32
    %29 = vector.broadcast %cst : f32 to vector<64x256xf32>
    %30 = arith.cmpf oge, %28, %29 : vector<64x256xf32>
    %cst_6 = arith.constant 2.000000e-01 : f32
    %31 = vector.broadcast %cst_6 : f32 to vector<64x256xf32>
    %32 = arith.mulf %31, %28 : vector<64x256xf32>
    %33 = arith.select %30, %28, %32 : vector<64x256xi1>, vector<64x256xf32>
    %c0_7 = arith.constant 0 : index
    %c0_8 = arith.constant 0 : index
    %34 = vector.load %arg5[%c0_7, %c0_8] : memref<128x64xf32, #tpu.memory_space<vmem>>, vector<128x64xf32>
    %cst_9 = arith.constant dense<0.000000e+00> : vector<128x256xf32>
    %35 = tpu.matmul %34, %33, %cst_9 {dimension_numbers = #tpu.dot_dimension_numbers<[1], [0], [0], [1], [0, 0, 1, 1], [], []>} : vector<128x64xf32>, vector<64x256xf32>, vector<128x256xf32> -> vector<128x256xf32>
    %c0_10 = arith.constant 0 : index
    %c0_11 = arith.constant 0 : index
    %36 = vector.load %arg6[%c0_10, %c0_11] : memref<128x1xf32, #tpu.memory_space<vmem>>, vector<128x1xf32>
    %37 = vector.broadcast %36 : vector<128x1xf32> to vector<128x256xf32>
    %38 = arith.mulf %35, %37 : vector<128x256xf32>
    %c0_12 = arith.constant 0 : index
    %c0_13 = arith.constant 0 : index
    %39 = vector.load %arg7[%c0_12, %c0_13] : memref<128x1xf32, #tpu.memory_space<vmem>>, vector<128x1xf32>
    %40 = vector.broadcast %39 : vector<128x1xf32> to vector<128x256xf32>
    %41 = arith.addf %38, %40 : vector<128x256xf32>
    %cst_14 = arith.constant 0.000000e+00 : f32
    %42 = vector.broadcast %cst_14 : f32 to vector<128x256xf32>
    %43 = arith.cmpf oge, %41, %42 : vector<128x256xf32>
    %cst_15 = arith.constant 2.000000e-01 : f32
    %44 = vector.broadcast %cst_15 : f32 to vector<128x256xf32>
    %45 = arith.mulf %44, %41 : vector<128x256xf32>
    %46 = arith.select %43, %41, %45 : vector<128x256xi1>, vector<128x256xf32>
    %c0_16 = arith.constant 0 : index
    %c0_17 = arith.constant 0 : index
    %47 = vector.load %arg8[%c0_16, %c0_17] : memref<128x1xf32, #tpu.memory_space<vmem>>, vector<128x1xf32>
    %48 = vector.broadcast %47 : vector<128x1xf32> to vector<128x256xf32>
    %49 = arith.mulf %46, %48 : vector<128x256xf32>
    %cst_18 = arith.constant dense<0.000000e+00> : vector<256xf32>
    %50 = vector.multi_reduction <add>, %49, %cst_18 [0] : vector<128x256xf32> to vector<256xf32>
    %51 = vector.shape_cast %50 : vector<256xf32> to vector<1x256xf32>
    %c0_19 = arith.constant 0 : index
    %c0_20 = arith.constant 0 : index
    %c0_21 = arith.constant 0 : index
    %52 = vector.load %arg9[%c0_19, %c0_20, %c0_21] : memref<1x1x256xf32, #tpu.memory_space<vmem>>, vector<1x1x256xf32>
    %53 = vector.shape_cast %52 : vector<1x1x256xf32> to vector<1x256xf32>
    %54 = vector.shape_cast %51 : vector<1x256xf32> to vector<1x1x256xf32>
    tpu.vector_store %arg9[%c0_19, %c0_20, %c0_21], %54 {strides = array<i32>} : memref<1x1x256xf32, #tpu.memory_space<vmem>>, vector<1x1x256xf32>,
    return
  }
  func.func @transform_0(%arg0: i32, %arg1: i32) -> (i32, i32, i32) {
    %c0_i32 = arith.constant 0 : i32
    %c0_i32_0 = arith.constant 0 : i32
    return %arg0, %c0_i32, %arg1 : i32, i32, i32
  }
  func.func @transform_1(%arg0: i32, %arg1: i32) -> (i32, i32) {
    %c0_i32 = arith.constant 0 : i32
    %c0_i32_0 = arith.constant 0 : i32
    %c0_i32_1 = arith.constant 0 : i32
    return %c0_i32, %c0_i32_0 : i32, i32
  }
  func.func @transform_2(%arg0: i32, %arg1: i32) -> (i32, i32) {
    %c0_i32 = arith.constant 0 : i32
    %c0_i32_0 = arith.constant 0 : i32
    %c0_i32_1 = arith.constant 0 : i32
    return %c0_i32, %c0_i32_0 : i32, i32
  }
  func.func @transform_3(%arg0: i32, %arg1: i32) -> (i32, i32) {
    %c0_i32 = arith.constant 0 : i32
    %c0_i32_0 = arith.constant 0 : i32
    %c0_i32_1 = arith.constant 0 : i32
    return %c0_i32, %c0_i32_0 : i32, i32
  }
  func.func @transform_4(%arg0: i32, %arg1: i32) -> (i32, i32) {
    %c0_i32 = arith.constant 0 : i32
    %c0_i32_0 = arith.constant 0 : i32
    %c0_i32_1 = arith.constant 0 : i32
    return %c0_i32, %c0_i32_0 : i32, i32
  }
  func.func @transform_5(%arg0: i32, %arg1: i32) -> (i32, i32) {
    %c0_i32 = arith.constant 0 : i32
    %c0_i32_0 = arith.constant 0 : i32
    %c0_i32_1 = arith.constant 0 : i32
    return %c0_i32, %c0_i32_0 : i32, i32
  }
  func.func @transform_6(%arg0: i32, %arg1: i32) -> (i32, i32) {
    %c0_i32 = arith.constant 0 : i32
    %c0_i32_0 = arith.constant 0 : i32
    %c0_i32_1 = arith.constant 0 : i32
    return %c0_i32, %c0_i32_0 : i32, i32
  }
  func.func @transform_7(%arg0: i32, %arg1: i32) -> (i32, i32, i32) {
    %c0_i32 = arith.constant 0 : i32
    %c0_i32_0 = arith.constant 0 : i32
    return %arg0, %c0_i32, %arg1 : i32, i32, i32
  }
}

</mosaic_0001>

<llo_original>
// kernel: pixel_discriminator.3
$region0: #{pixel_discriminator.3}
  #allocation0 [shape = 'u32[]', space=smem, size = 0x4, offset = 0x4, fixed_abs, tag = 'smem constant byte address 0x4 - core index']
  #allocation1 [shape = 'u32[144,128]{1,0:T(1,128)}', space=vmem, size = 0x12000, scoped, tag = 'internal scratch']
  %s0 = inlined_call_operand.vmem [shape: f32[2,4,256], index: 0, kind: input, shape index: {}]
  %s1 = inlined_call_operand.vmem [shape: f32[64,4], index: 1, kind: input, shape index: {}]
  %s2 = inlined_call_operand.vmem [shape: f32[64,1], index: 2, kind: input, shape index: {}]
  %s3 = inlined_call_operand.vmem [shape: f32[128,64], index: 3, kind: input, shape index: {}]
  %s4 = inlined_call_operand.vmem [shape: f32[128,1], index: 4, kind: input, shape index: {}]
  %s5 = inlined_call_operand.vmem [shape: f32[128,1], index: 5, kind: input, shape index: {}]
  %s6 = inlined_call_operand.vmem [shape: f32[128,1], index: 6, kind: input, shape index: {}]
  %s7 = inlined_call_operand.vmem [shape: f32[2,1,256], index: 7, kind: output, shape index: {}]
  %s8 = sld [smem:[#allocation0]]
  $region61: #{pixel_discriminator.3} parent=0
    _
  %s10 = ssub.s32 1, %s8
  %s11 = scalar_select 0, %s10, %s8
  loop: start=0, step=1, limit=4
  $region2: #{pixel_discriminator.3} parent=0 // loop_pre_header
    _
  $region3: #{pixel_discriminator.3} parent=0 // loop_header
    %s13 = sphi 0, %s17
    %p14 = scmp.ge.s32.totalorder %s13, 4
    %s20 = sphi 0, %s32
    %s21 = sphi 0, %s28
    %s22 = sphi 0, %s20
    %s23 = sphi 0, %s21
    %s24 = sphi 0, %s22
    %s25 = sphi 0, %s23
    %s37 = sphi 0, %s39
    %s40 = sphi 0, %s37
    %s41 = sphi 0, %s40
    %s57 = sphi 0, %s41
    %s61 = sphi 0, %s61
    %s63 = sphi 0, %s61
    %s64 = sphi 0, %s63
    %s78 = sphi 0, %s64
    %s82 = sphi 0, %s82
    %s84 = sphi 0, %s82
    %s85 = sphi 0, %s84
    %s99 = sphi 0, %s85
    %s103 = sphi 0, %s103
    %s105 = sphi 0, %s103
    %s106 = sphi 0, %s105
    %s120 = sphi 0, %s106
    %s124 = sphi 0, %s124
    %s126 = sphi 0, %s124
    %s127 = sphi 0, %s126
    %s141 = sphi 0, %s127
    %s145 = sphi 0, %s145
    %s147 = sphi 0, %s145
    %s148 = sphi 0, %s147
    %s162 = sphi 0, %s148
    %s166 = sphi 0, %s166
    %s168 = sphi 0, %s166
    %s169 = sphi 0, %s168
    %s183 = sphi 0, %s169
    %s191 = sphi 0, %s193
    %s194 = sphi 0, %s191
    %s195 = sphi 0, %s194
    %s211 = sphi 0, %s195
  $region4: #{pixel_discriminator.3} parent=0 // loop_header_branch
    %16 = sbr.rel (%p14) target = $region8
  $region5: #{pixel_discriminator.3} parent=0 // loop_body
    %s18 = ssub.s32 %s13, 1
    %s19 = ssub.s32 %s13, 2
    %s26 = sadd.s32 1, %s21
    %p27 = scmp.ge.s32.totalorder %s26, 1
    %s28 = scalar_select %p27, 0, %s26
    %s29 = sadd.s32 1, %s20
    %s30 = scalar_select %p27, %s29, %s20
    %p31 = scmp.ge.s32.totalorder %s30, 2
    %s32 = scalar_select %p31, 0, %s30
    %s33 = ssub.s32 %s20, %s32
    %s34 = ssub.s32 %s21, %s28
    %s35 = sor.u32 %s33, %s34
    %p36 = scmp.eq.s32.totalorder %s35, 0
    %s38 = sadd.s32 %s37, 1
    %s39 = scalar_select %p36, %s37, %s38
    %p42 = pneg %p36
    %p43 = scmp.eq.s32.totalorder %s13, 1
    %p44 = por %p42, %p43
    %p45 = scmp.ne.s32.totalorder %s37, %s40
    %p46 = scmp.eq.s32.totalorder %s13, 0
    %p47 = por %p45, %p46
    %p48 = scmp.ne.s32.totalorder %s37, %s40
    %p49 = scmp.eq.s32.totalorder %s18, 1
    %p50 = por %p48, %p49
    %p51 = scmp.ne.s32.totalorder %s40, %s41
    %p52 = scmp.eq.s32.totalorder %s18, 0
    %p53 = por %p51, %p52
    %p54 = scmp.ne.s32.totalorder %s40, %s41
    %p55 = scmp.eq.s32.totalorder %s19, 1
    %p56 = por %p54, %p55
    %p58 = scmp.ne.s32.totalorder %s41, %s57
    %p59 = scmp.eq.s32.totalorder %s19, 0
    %p60 = por %p58, %p59
    %s62 = sadd.s32 %s61, 1
    %p65 = scmp.eq.s32.totalorder %s13, 1
    %p66 = scmp.ne.s32.totalorder %s61, %s63
    %p67 = scmp.eq.s32.totalorder %s13, 0
    %p68 = por %p66, %p67
    %p69 = scmp.ne.s32.totalorder %s61, %s63
    %p70 = scmp.eq.s32.totalorder %s18, 1
    %p71 = por %p69, %p70
    %p72 = scmp.ne.s32.totalorder %s63, %s64
    %p73 = scmp.eq.s32.totalorder %s18, 0
    %p74 = por %p72, %p73
    %p75 = scmp.ne.s32.totalorder %s63, %s64
    %p76 = scmp.eq.s32.totalorder %s19, 1
    %p77 = por %p75, %p76
    %p79 = scmp.ne.s32.totalorder %s64, %s78
    %p80 = scmp.eq.s32.totalorder %s19, 0
    %p81 = por %p79, %p80
    %s83 = sadd.s32 %s82, 1
    %p86 = scmp.eq.s32.totalorder %s13, 1
    %p87 = scmp.ne.s32.totalorder %s82, %s84
    %p88 = scmp.eq.s32.totalorder %s13, 0
    %p89 = por %p87, %p88
    %p90 = scmp.ne.s32.totalorder %s82, %s84
    %p91 = scmp.eq.s32.totalorder %s18, 1
    %p92 = por %p90, %p91
    %p93 = scmp.ne.s32.totalorder %s84, %s85
    %p94 = scmp.eq.s32.totalorder %s18, 0
    %p95 = por %p93, %p94
    %p96 = scmp.ne.s32.totalorder %s84, %s85
    %p97 = scmp.eq.s32.totalorder %s19, 1
    %p98 = por %p96, %p97
    %p100 = scmp.ne.s32.totalorder %s85, %s99
    %p101 = scmp.eq.s32.totalorder %s19, 0
    %p102 = por %p100, %p101
    %s104 = sadd.s32 %s103, 1
    %p107 = scmp.eq.s32.totalorder %s13, 1
    %p108 = scmp.ne.s32.totalorder %s103, %s105
    %p109 = scmp.eq.s32.totalorder %s13, 0
    %p110 = por %p108, %p109
    %p111 = scmp.ne.s32.totalorder %s103, %s105
    %p112 = scmp.eq.s32.totalorder %s18, 1
    %p113 = por %p111, %p112
    %p114 = scmp.ne.s32.totalorder %s105, %s106
    %p115 = scmp.eq.s32.totalorder %s18, 0
    %p116 = por %p114, %p115
    %p117 = scmp.ne.s32.totalorder %s105, %s106
    %p118 = scmp.eq.s32.totalorder %s19, 1
    %p119 = por %p117, %p118
    %p121 = scmp.ne.s32.totalorder %s106, %s120
    %p122 = scmp.eq.s32.totalorder %s19, 0
    %p123 = por %p121, %p122
    %s125 = sadd.s32 %s124, 1
    %p128 = scmp.eq.s32.totalorder %s13, 1
    %p129 = scmp.ne.s32.totalorder %s124, %s126
    %p130 = scmp.eq.s32.totalorder %s13, 0
    %p131 = por %p129, %p130
    %p132 = scmp.ne.s32.totalorder %s124, %s126
    %p133 = scmp.eq.s32.totalorder %s18, 1
    %p134 = por %p132, %p133
    %p135 = scmp.ne.s32.totalorder %s126, %s127
    %p136 = scmp.eq.s32.totalorder %s18, 0
    %p137 = por %p135, %p136
    %p138 = scmp.ne.s32.totalorder %s126, %s127
    %p139 = scmp.eq.s32.totalorder %s19, 1
    %p140 = por %p138, %p139
    %p142 = scmp.ne.s32.totalorder %s127, %s141
    %p143 = scmp.eq.s32.totalorder %s19, 0
    %p144 = por %p142, %p143
    %s146 = sadd.s32 %s145, 1
    %p149 = scmp.eq.s32.totalorder %s13, 1
    %p150 = scmp.ne.s32.totalorder %s145, %s147
    %p151 = scmp.eq.s32.totalorder %s13, 0
    %p152 = por %p150, %p151
    %p153 = scmp.ne.s32.totalorder %s145, %s147
    %p154 = scmp.eq.s32.totalorder %s18, 1
    %p155 = por %p153, %p154
    %p156 = scmp.ne.s32.totalorder %s147, %s148
    %p157 = scmp.eq.s32.totalorder %s18, 0
    %p158 = por %p156, %p157
    %p159 = scmp.ne.s32.totalorder %s147, %s148
    %p160 = scmp.eq.s32.totalorder %s19, 1
    %p161 = por %p159, %p160
    %p163 = scmp.ne.s32.totalorder %s148, %s162
    %p164 = scmp.eq.s32.totalorder %s19, 0
    %p165 = por %p163, %p164
    %s167 = sadd.s32 %s166, 1
    %p170 = scmp.eq.s32.totalorder %s13, 1
    %p171 = scmp.ne.s32.totalorder %s166, %s168
    %p172 = scmp.eq.s32.totalorder %s13, 0
    %p173 = por %p171, %p172
    %p174 = scmp.ne.s32.totalorder %s166, %s168
    %p175 = scmp.eq.s32.totalorder %s18, 1
    %p176 = por %p174, %p175
    %p177 = scmp.ne.s32.totalorder %s168, %s169
    %p178 = scmp.eq.s32.totalorder %s18, 0
    %p179 = por %p177, %p178
    %p180 = scmp.ne.s32.totalorder %s168, %s169
    %p181 = scmp.eq.s32.totalorder %s19, 1
    %p182 = por %p180, %p181
    %p184 = scmp.ne.s32.totalorder %s169, %s183
    %p185 = scmp.eq.s32.totalorder %s19, 0
    %p186 = por %p184, %p185
    %s187 = ssub.s32 %s20, %s32
    %s188 = ssub.s32 %s21, %s28
    %s189 = sor.u32 %s187, %s188
    %p190 = scmp.eq.s32.totalorder %s189, 0
    %s192 = sadd.s32 %s191, 1
    %s193 = scalar_select %p190, %s191, %s192
    %p196 = pneg %p190
    %p197 = scmp.eq.s32.totalorder %s13, 1
    %p198 = por %p196, %p197
    %p199 = scmp.ne.s32.totalorder %s191, %s194
    %p200 = scmp.eq.s32.totalorder %s13, 0
    %p201 = por %p199, %p200
    %p202 = scmp.ne.s32.totalorder %s191, %s194
    %p203 = scmp.eq.s32.totalorder %s18, 1
    %p204 = por %p202, %p203
    %p205 = scmp.ne.s32.totalorder %s194, %s195
    %p206 = scmp.eq.s32.totalorder %s18, 0
    %p207 = por %p205, %p206
    %p208 = scmp.ne.s32.totalorder %s194, %s195
    %p209 = scmp.eq.s32.totalorder %s19, 1
    %p210 = por %p208, %p209
    %p212 = scmp.ne.s32.totalorder %s195, %s211
    %p213 = scmp.eq.s32.totalorder %s19, 0
    %p214 = por %p212, %p213
    %p215 = scmp.le.s32.totalorder 1, %s13
    %p216 = scmp.lt.s32.totalorder %s13, 3
    %p217 = pnand %p215, %p216
    %p218 = pneg %p217
    // Predicated region
    $region9: #{pixel_discriminator.3} parent=5 // pred_check
      _
    $region10: #{pixel_discriminator.3} parent=5 // pred_check_branch
      %220 = sbr.rel (%p217) target = $region12
    $region11: #{pixel_discriminator.3} parent=5 // pred_region
      %s221 = ssub.s32 %s13, 1
      // Predicated region
      $region13: #{pixel_discriminator.3} parent=11 // pred_check
        %p222 = pneg %p74
      $region14: #{pixel_discriminator.3} parent=11 // pred_check_branch
        %224 = sbr.rel (%p222) target = $region16
      $region15: #{pixel_discriminator.3} parent=11 // pred_region
        _
      $region16: #{pixel_discriminator.3} parent=11 // pred_fallthru
        _
      // Predicated region
      $region17: #{pixel_discriminator.3} parent=11 // pred_check
        %p225 = pneg %p95
      $region18: #{pixel_discriminator.3} parent=11 // pred_check_branch
        %227 = sbr.rel (%p225) target = $region20
      $region19: #{pixel_discriminator.3} parent=11 // pred_region
        _
      $region20: #{pixel_discriminator.3} parent=11 // pred_fallthru
        _
      // Predicated region
      $region21: #{pixel_discriminator.3} parent=11 // pred_check
        %p228 = pneg %p116
      $region22: #{pixel_discriminator.3} parent=11 // pred_check_branch
        %230 = sbr.rel (%p228) target = $region24
      $region23: #{pixel_discriminator.3} parent=11 // pred_region
        _
      $region24: #{pixel_discriminator.3} parent=11 // pred_fallthru
        _
      // Predicated region
      $region25: #{pixel_discriminator.3} parent=11 // pred_check
        %p231 = pneg %p137
      $region26: #{pixel_discriminator.3} parent=11 // pred_check_branch
        %233 = sbr.rel (%p231) target = $region28
      $region27: #{pixel_discriminator.3} parent=11 // pred_region
        _
      $region28: #{pixel_discriminator.3} parent=11 // pred_fallthru
        _
      // Predicated region
      $region29: #{pixel_discriminator.3} parent=11 // pred_check
        %p234 = pneg %p158
      $region30: #{pixel_discriminator.3} parent=11 // pred_check_branch
        %236 = sbr.rel (%p234) target = $region32
      $region31: #{pixel_discriminator.3} parent=11 // pred_region
        _
      $region32: #{pixel_discriminator.3} parent=11 // pred_fallthru
        _
      // Predicated region
      $region33: #{pixel_discriminator.3} parent=11 // pred_check
        %p237 = pneg %p179
      $region34: #{pixel_discriminator.3} parent=11 // pred_check_branch
        %239 = sbr.rel (%p237) target = $region36
      $region35: #{pixel_discriminator.3} parent=11 // pred_region
        _
      $region36: #{pixel_discriminator.3} parent=11 // pred_fallthru
        _
    $region12: #{pixel_discriminator.3} parent=5 // pred_fallthru
      _
    %p240 = scmp.lt.s32.totalorder %s13, 2
    // Predicated region
    $region37: #{pixel_discriminator.3} parent=5 // pred_check
      %p241 = pneg %p240
    $region38: #{pixel_discriminator.3} parent=5 // pred_check_branch
      %243 = sbr.rel (%p241) target = $region40
    $region39: #{pixel_discriminator.3} parent=5 // pred_region
      // Predicated region
      $region41: #{pixel_discriminator.3} parent=39 // pred_check
        %p244 = pneg %p47
      $region42: #{pixel_discriminator.3} parent=39 // pred_check_branch
        %246 = sbr.rel (%p244) target = $region44
      $region43: #{pixel_discriminator.3} parent=39 // pred_region
        %s247 = smul.u32 2, %s21
        %p248 = scmp.lt.s32.totalorder %s20, 1
        %s249 = scalar_select %p248, %s20, 1
        %p250 = scmp.lt.s32.totalorder %s247, 1
        %s251 = scalar_select %p250, %s247, 1
        %s252 = smul.addr %s249, 2
        %s253 = sadd.s32 %s251, %s252
        %s254 = smul.addr %s253, 4
        %s255 = scalar_lea.vmem %s0, %s254
        %s256 = smul.u32 2, %s21
      $region44: #{pixel_discriminator.3} parent=39 // pred_fallthru
        _
    $region40: #{pixel_discriminator.3} parent=5 // pred_fallthru
      _
    %p257 = scmp.le.s32.totalorder 1, %s13
    %p258 = scmp.lt.s32.totalorder %s13, 3
    %p259 = pnand %p257, %p258
    %p260 = pneg %p259
    // Predicated region
    $region45: #{pixel_discriminator.3} parent=5 // pred_check
      _
    $region46: #{pixel_discriminator.3} parent=5 // pred_check_branch
      %262 = sbr.rel (%p259) target = $region48
    $region47: #{pixel_discriminator.3} parent=5 // pred_region
      %s263 = ssub.s32 %s13, 1
      %s264 = smul.u32 2, %s23
      %p265 = scmp.lt.s32.totalorder %s22, 1
      %s266 = scalar_select %p265, %s22, 1
      %p267 = scmp.lt.s32.totalorder %s264, 1
      %s268 = scalar_select %p267, %s264, 1
      %s269 = smul.addr %s266, 2
      %s270 = sadd.s32 %s268, %s269
      %s271 = smul.addr %s270, 4
      %s272 = scalar_lea.vmem %s0, %s271
      %p273 = pneg %p53
      %p274 = pneg %p50
      %p275 = pneg %p74
      %p276 = pneg %p71
      %p277 = pneg %p95
      %p278 = pneg %p92
      %p279 = pneg %p116
      %p280 = pneg %p113
      %p281 = pneg %p137
      %p282 = pneg %p134
      %p283 = pneg %p158
      %p284 = pneg %p155
      %p285 = pneg %p179
      %p286 = pneg %p176
      %p287 = pneg %p207
      %p288 = pneg %p204
      %s289 = smul.u32 2, %s23
      %p290 = scmp.lt.s32.totalorder %s22, 1
      %s291 = scalar_select %p290, %s22, 1
      %p292 = scmp.lt.s32.totalorder %s289, 1
      %s293 = scalar_select %p292, %s289, 1
      %s294 = smul.addr %s291, 2
      %s295 = sadd.s32 %s293, %s294
      %s296 = scalar_lea.vmem %s7, %s295
      %s297 = smul.u32 2, %s23
      %p298 = scmp.lt.s32.totalorder %s22, 1
      %s299 = scalar_select %p298, %s22, 1
      %p300 = scmp.lt.s32.totalorder %s297, 1
      %s301 = scalar_select %p300, %s297, 1
      %s302 = smul.addr %s299, 2
      %s303 = sadd.s32 %s301, %s302
      %s304 = smul.addr %s303, 4
      %s305 = scalar_lea.vmem %s0, %s304
      %s306 = smul.u32 2, %s23
      %s307 = smul.u32 2, %s23
      %p308 = scmp.lt.s32.totalorder %s22, 1
      %s309 = scalar_select %p308, %s22, 1
      %p310 = scmp.lt.s32.totalorder %s307, 1
      %s311 = scalar_select %p310, %s307, 1
      %s312 = smul.addr %s309, 2
      %s313 = sadd.s32 %s311, %s312
      %s314 = scalar_lea.vmem %s7, %s313
      %s315 = smul.u32 2, %s23
      %v316 = vld [vmem:[%s305] sm:$0xff]
      %v317 = vld [vmem:[%s1] sm:$0xff]
      %v318 = vld [vmem:[%s1 + $0x8] sm:$0xff]
      %v319 = vld [vmem:[%s1 + $0x10] sm:$0xff]
      %v320 = vld [vmem:[%s1 + $0x18] sm:$0xff]
      %v321 = vld [vmem:[%s1 + $0x20] sm:$0xff]
      %v322 = vld [vmem:[%s1 + $0x28] sm:$0xff]
      %v323 = vld [vmem:[%s1 + $0x30] sm:$0xff]
      %v324 = vld [vmem:[%s1 + $0x38] sm:$0xff]
      %v325 = vld [vmem:[%s2] sm:$0xff]
      %v326 = vld [vmem:[%s2 + $0x8] sm:$0xff]
      %v327 = vld [vmem:[%s2 + $0x10] sm:$0xff]
      %v328 = vld [vmem:[%s2 + $0x18] sm:$0xff]
      %v329 = vld [vmem:[%s2 + $0x20] sm:$0xff]
      %v330 = vld [vmem:[%s2 + $0x28] sm:$0xff]
      %v331 = vld [vmem:[%s2 + $0x30] sm:$0xff]
      %v332 = vld [vmem:[%s2 + $0x38] sm:$0xff]
      %v334 = vlaneseq
      %v335 = vshrl.u32 %v334, 7
      %v336 = vsub.s32 0, %v335
      %v337 = vrot.slane %v316, %v336
      %v338 = vlaneseq
      %v339 = vshrl.u32 %v338, 7
      %v340 = vsub.s32 4, %v339
      %v341 = vrot.slane %v316, %v340
      %v344 = vlaneseq
      %v345 = vshrl.u32 %v344, 7
      %v346 = vsub.s32 0, %v345
      %v347 = vrot.slane %v337, %v346
      %v348 = vlaneseq
      %v349 = vshrl.u32 %v348, 7
      %v350 = vsub.s32 0, %v349
      %v351 = vrot.slane %v341, %v350
      %353 = vset.pattern.permute.xlu0 0
      %354 = vperm.xlu0 %353, %v317
      %v355 = vpop.permute.xlu0 %354
      %358 = vset.pattern.permute.xlu0 0
      %359 = vperm.xlu0 %358, %v318
      %v360 = vpop.permute.xlu0 %359
      %363 = vset.pattern.permute.xlu0 0
      %364 = vperm.xlu0 %363, %v319
      %v365 = vpop.permute.xlu0 %364
      %368 = vset.pattern.permute.xlu0 0
      %369 = vperm.xlu0 %368, %v320
      %v370 = vpop.permute.xlu0 %369
      %373 = vset.pattern.permute.xlu0 0
      %374 = vperm.xlu0 %373, %v321
      %v375 = vpop.permute.xlu0 %374
      %378 = vset.pattern.permute.xlu0 0
      %379 = vperm.xlu0 %378, %v322
      %v380 = vpop.permute.xlu0 %379
      %383 = vset.pattern.permute.xlu0 0
      %384 = vperm.xlu0 %383, %v323
      %v385 = vpop.permute.xlu0 %384
      %388 = vset.pattern.permute.xlu0 0
      %389 = vperm.xlu0 %388, %v324
      %v390 = vpop.permute.xlu0 %389
      %v392 = vmul.f32 %v347, %v355
      %v393 = vmul.f32 %v351, %v355
      %v394 = vmul.f32 %v347, %v360
      %v395 = vmul.f32 %v351, %v360
      %v396 = vmul.f32 %v347, %v365
      %v397 = vmul.f32 %v351, %v365
      %v398 = vmul.f32 %v347, %v370
      %v399 = vmul.f32 %v351, %v370
      %v400 = vmul.f32 %v347, %v375
      %v401 = vmul.f32 %v351, %v375
      %v402 = vmul.f32 %v347, %v380
      %v403 = vmul.f32 %v351, %v380
      %v404 = vmul.f32 %v347, %v385
      %v405 = vmul.f32 %v351, %v385
      %v406 = vmul.f32 %v347, %v390
      %v407 = vmul.f32 %v351, %v390
      %v408 = vlaneseq
      %v409 = vshrl.u32 %v408, 7
      %v410 = vsub.s32 1, %v409
      %v411 = vrot.slane %v316, %v410
      %v412 = vlaneseq
      %v413 = vshrl.u32 %v412, 7
      %v414 = vsub.s32 5, %v413
      %v415 = vrot.slane %v316, %v414
      %v418 = vlaneseq
      %v419 = vshrl.u32 %v418, 7
      %v420 = vsub.s32 1, %v419
      %v421 = vrot.slane %v411, %v420
      %v422 = vlaneseq
      %v423 = vshrl.u32 %v422, 7
      %v424 = vsub.s32 1, %v423
      %v425 = vrot.slane %v415, %v424
      %426 = vset.pattern.permute.xlu0 1
      %427 = vperm.xlu0 %426, %v317
      %v428 = vpop.permute.xlu0 %427
      %430 = vset.pattern.permute.xlu0 1
      %431 = vperm.xlu0 %430, %v318
      %v432 = vpop.permute.xlu0 %431
      %434 = vset.pattern.permute.xlu0 1
      %435 = vperm.xlu0 %434, %v319
      %v436 = vpop.permute.xlu0 %435
      %438 = vset.pattern.permute.xlu0 1
      %439 = vperm.xlu0 %438, %v320
      %v440 = vpop.permute.xlu0 %439
      %442 = vset.pattern.permute.xlu0 1
      %443 = vperm.xlu0 %442, %v321
      %v444 = vpop.permute.xlu0 %443
      %446 = vset.pattern.permute.xlu0 1
      %447 = vperm.xlu0 %446, %v322
      %v448 = vpop.permute.xlu0 %447
      %450 = vset.pattern.permute.xlu0 1
      %451 = vperm.xlu0 %450, %v323
      %v452 = vpop.permute.xlu0 %451
      %454 = vset.pattern.permute.xlu0 1
      %455 = vperm.xlu0 %454, %v324
      %v456 = vpop.permute.xlu0 %455
      %v458 = vmul.f32 %v421, %v428
      %v459 = vmul.f32 %v425, %v428
      %v460 = vmul.f32 %v421, %v432
      %v461 = vmul.f32 %v425, %v432
      %v462 = vmul.f32 %v421, %v436
      %v463 = vmul.f32 %v425, %v436
      %v464 = vmul.f32 %v421, %v440
      %v465 = vmul.f32 %v425, %v440
      %v466 = vmul.f32 %v421, %v444
      %v467 = vmul.f32 %v425, %v444
      %v468 = vmul.f32 %v421, %v448
      %v469 = vmul.f32 %v425, %v448
      %v470 = vmul.f32 %v421, %v452
      %v471 = vmul.f32 %v425, %v452
      %v472 = vmul.f32 %v421, %v456
      %v473 = vmul.f32 %v425, %v456
      %v474 = vadd.f32 %v392, %v458
      %v475 = vadd.f32 %v393, %v459
      %v476 = vadd.f32 %v394, %v460
      %v477 = vadd.f32 %v395, %v461
      %v478 = vadd.f32 %v396, %v462
      %v479 = vadd.f32 %v397, %v463
      %v480 = vadd.f32 %v398, %v464
      %v481 = vadd.f32 %v399, %v465
      %v482 = vadd.f32 %v400, %v466
      %v483 = vadd.f32 %v401, %v467
      %v484 = vadd.f32 %v402, %v468
      %v485 = vadd.f32 %v403, %v469
      %v486 = vadd.f32 %v404, %v470
      %v487 = vadd.f32 %v405, %v471
      %v488 = vadd.f32 %v406, %v472
      %v489 = vadd.f32 %v407, %v473
      %v490 = vlaneseq
      %v491 = vshrl.u32 %v490, 7
      %v492 = vsub.s32 2, %v491
      %v493 = vrot.slane %v316, %v492
      %v494 = vlaneseq
      %v495 = vshrl.u32 %v494, 7
      %v496 = vsub.s32 6, %v495
      %v497 = vrot.slane %v316, %v496
      %v500 = vlaneseq
      %v501 = vshrl.u32 %v500, 7
      %v502 = vsub.s32 2, %v501
      %v503 = vrot.slane %v493, %v502
      %v504 = vlaneseq
      %v505 = vshrl.u32 %v504, 7
      %v506 = vsub.s32 2, %v505
      %v507 = vrot.slane %v497, %v506
      %508 = vset.pattern.permute.xlu0 2
      %509 = vperm.xlu0 %508, %v317
      %v510 = vpop.permute.xlu0 %509
      %512 = vset.pattern.permute.xlu0 2
      %513 = vperm.xlu0 %512, %v318
      %v514 = vpop.permute.xlu0 %513
      %516 = vset.pattern.permute.xlu0 2
      %517 = vperm.xlu0 %516, %v319
      %v518 = vpop.permute.xlu0 %517
      %520 = vset.pattern.permute.xlu0 2
      %521 = vperm.xlu0 %520, %v320
      %v522 = vpop.permute.xlu0 %521
      %524 = vset.pattern.permute.xlu0 2
      %525 = vperm.xlu0 %524, %v321
      %v526 = vpop.permute.xlu0 %525
      %528 = vset.pattern.permute.xlu0 2
      %529 = vperm.xlu0 %528, %v322
      %v530 = vpop.permute.xlu0 %529
      %532 = vset.pattern.permute.xlu0 2
      %533 = vperm.xlu0 %532, %v323
      %v534 = vpop.permute.xlu0 %533
      %536 = vset.pattern.permute.xlu0 2
      %537 = vperm.xlu0 %536, %v324
      %v538 = vpop.permute.xlu0 %537
      %v540 = vmul.f32 %v503, %v510
      %v541 = vmul.f32 %v507, %v510
      %v542 = vmul.f32 %v503, %v514
      %v543 = vmul.f32 %v507, %v514
      %v544 = vmul.f32 %v503, %v518
      %v545 = vmul.f32 %v507, %v518
      %v546 = vmul.f32 %v503, %v522
      %v547 = vmul.f32 %v507, %v522
      %v548 = vmul.f32 %v503, %v526
      %v549 = vmul.f32 %v507, %v526
      %v550 = vmul.f32 %v503, %v530
      %v551 = vmul.f32 %v507, %v530
      %v552 = vmul.f32 %v503, %v534
      %v553 = vmul.f32 %v507, %v534
      %v554 = vmul.f32 %v503, %v538
      %v555 = vmul.f32 %v507, %v538
      %v556 = vadd.f32 %v474, %v540
      %v557 = vadd.f32 %v475, %v541
      %v558 = vadd.f32 %v476, %v542
      %v559 = vadd.f32 %v477, %v543
      %v560 = vadd.f32 %v478, %v544
      %v561 = vadd.f32 %v479, %v545
      %v562 = vadd.f32 %v480, %v546
      %v563 = vadd.f32 %v481, %v547
      %v564 = vadd.f32 %v482, %v548
      %v565 = vadd.f32 %v483, %v549
      %v566 = vadd.f32 %v484, %v550
      %v567 = vadd.f32 %v485, %v551
      %v568 = vadd.f32 %v486, %v552
      %v569 = vadd.f32 %v487, %v553
      %v570 = vadd.f32 %v488, %v554
      %v571 = vadd.f32 %v489, %v555
      %v572 = vlaneseq
      %v573 = vshrl.u32 %v572, 7
      %v574 = vsub.s32 3, %v573
      %v575 = vrot.slane %v316, %v574
      %v576 = vlaneseq
      %v577 = vshrl.u32 %v576, 7
      %v578 = vsub.s32 7, %v577
      %v579 = vrot.slane %v316, %v578
      %v582 = vlaneseq
      %v583 = vshrl.u32 %v582, 7
      %v584 = vsub.s32 3, %v583
      %v585 = vrot.slane %v575, %v584
      %v586 = vlaneseq
      %v587 = vshrl.u32 %v586, 7
      %v588 = vsub.s32 3, %v587
      %v589 = vrot.slane %v579, %v588
      %590 = vset.pattern.permute.xlu0 3
      %591 = vperm.xlu0 %590, %v317
      %v592 = vpop.permute.xlu0 %591
      %594 = vset.pattern.permute.xlu0 3
      %595 = vperm.xlu0 %594, %v318
      %v596 = vpop.permute.xlu0 %595
      %598 = vset.pattern.permute.xlu0 3
      %599 = vperm.xlu0 %598, %v319
      %v600 = vpop.permute.xlu0 %599
      %602 = vset.pattern.permute.xlu0 3
      %603 = vperm.xlu0 %602, %v320
      %v604 = vpop.permute.xlu0 %603
      %606 = vset.pattern.permute.xlu0 3
      %607 = vperm.xlu0 %606, %v321
      %v608 = vpop.permute.xlu0 %607
      %610 = vset.pattern.permute.xlu0 3
      %611 = vperm.xlu0 %610, %v322
      %v612 = vpop.permute.xlu0 %611
      %614 = vset.pattern.permute.xlu0 3
      %615 = vperm.xlu0 %614, %v323
      %v616 = vpop.permute.xlu0 %615
      %618 = vset.pattern.permute.xlu0 3
      %619 = vperm.xlu0 %618, %v324
      %v620 = vpop.permute.xlu0 %619
      %v622 = vmul.f32 %v585, %v592
      %v623 = vmul.f32 %v589, %v592
      %v624 = vmul.f32 %v585, %v596
      %v625 = vmul.f32 %v589, %v596
      %v626 = vmul.f32 %v585, %v600
      %v627 = vmul.f32 %v589, %v600
      %v628 = vmul.f32 %v585, %v604
      %v629 = vmul.f32 %v589, %v604
      %v630 = vmul.f32 %v585, %v608
      %v631 = vmul.f32 %v589, %v608
      %v632 = vmul.f32 %v585, %v612
      %v633 = vmul.f32 %v589, %v612
      %v634 = vmul.f32 %v585, %v616
      %v635 = vmul.f32 %v589, %v616
      %v636 = vmul.f32 %v585, %v620
      %v637 = vmul.f32 %v589, %v620
      %v638 = vadd.f32 %v556, %v622
      %v639 = vadd.f32 %v557, %v623
      %v640 = vadd.f32 %v558, %v624
      %v641 = vadd.f32 %v559, %v625
      %v642 = vadd.f32 %v560, %v626
      %v643 = vadd.f32 %v561, %v627
      %v644 = vadd.f32 %v562, %v628
      %v645 = vadd.f32 %v563, %v629
      %v646 = vadd.f32 %v564, %v630
      %v647 = vadd.f32 %v565, %v631
      %v648 = vadd.f32 %v566, %v632
      %v649 = vadd.f32 %v567, %v633
      %v650 = vadd.f32 %v568, %v634
      %v651 = vadd.f32 %v569, %v635
      %v652 = vadd.f32 %v570, %v636
      %v653 = vadd.f32 %v571, %v637
      %655 = vset.pattern.permute.xlu0 0
      %656 = vperm.xlu0 %655, %v325
      %v657 = vpop.permute.xlu0 %656
      %660 = vset.pattern.permute.xlu0 0
      %661 = vperm.xlu0 %660, %v326
      %v662 = vpop.permute.xlu0 %661
      %665 = vset.pattern.permute.xlu0 0
      %666 = vperm.xlu0 %665, %v327
      %v667 = vpop.permute.xlu0 %666
      %670 = vset.pattern.permute.xlu0 0
      %671 = vperm.xlu0 %670, %v328
      %v672 = vpop.permute.xlu0 %671
      %675 = vset.pattern.permute.xlu0 0
      %676 = vperm.xlu0 %675, %v329
      %v677 = vpop.permute.xlu0 %676
      %680 = vset.pattern.permute.xlu0 0
      %681 = vperm.xlu0 %680, %v330
      %v682 = vpop.permute.xlu0 %681
      %685 = vset.pattern.permute.xlu0 0
      %686 = vperm.xlu0 %685, %v331
      %v687 = vpop.permute.xlu0 %686
      %690 = vset.pattern.permute.xlu0 0
      %691 = vperm.xlu0 %690, %v332
      %v692 = vpop.permute.xlu0 %691
      %v694 = vadd.f32 %v638, %v657
      %v695 = vadd.f32 %v639, %v657
      %v696 = vadd.f32 %v640, %v662
      %v697 = vadd.f32 %v641, %v662
      %v698 = vadd.f32 %v642, %v667
      %v699 = vadd.f32 %v643, %v667
      %v700 = vadd.f32 %v644, %v672
      %v701 = vadd.f32 %v645, %v672
      %v702 = vadd.f32 %v646, %v677
      %v703 = vadd.f32 %v647, %v677
      %v704 = vadd.f32 %v648, %v682
      %v705 = vadd.f32 %v649, %v682
      %v706 = vadd.f32 %v650, %v687
      %v707 = vadd.f32 %v651, %v687
      %v708 = vadd.f32 %v652, %v692
      %v709 = vadd.f32 %v653, %v692
      %vm710 = vcmp.ge.f32.partialorder %v694, 0.0
      %vm711 = vcmp.ge.f32.partialorder %v695, 0.0
      %vm712 = vcmp.ge.f32.partialorder %v696, 0.0
      %vm713 = vcmp.ge.f32.partialorder %v697, 0.0
      %vm714 = vcmp.ge.f32.partialorder %v698, 0.0
      %vm715 = vcmp.ge.f32.partialorder %v699, 0.0
      %vm716 = vcmp.ge.f32.partialorder %v700, 0.0
      %vm717 = vcmp.ge.f32.partialorder %v701, 0.0
      %vm718 = vcmp.ge.f32.partialorder %v702, 0.0
      %vm719 = vcmp.ge.f32.partialorder %v703, 0.0
      %vm720 = vcmp.ge.f32.partialorder %v704, 0.0
      %vm721 = vcmp.ge.f32.partialorder %v705, 0.0
      %vm722 = vcmp.ge.f32.partialorder %v706, 0.0
      %vm723 = vcmp.ge.f32.partialorder %v707, 0.0
      %vm724 = vcmp.ge.f32.partialorder %v708, 0.0
      %vm725 = vcmp.ge.f32.partialorder %v709, 0.0
      %v726 = vmul.f32 %v694, 0.2
      %v727 = vmul.f32 %v695, 0.2
      %v728 = vmul.f32 %v696, 0.2
      %v729 = vmul.f32 %v697, 0.2
      %v730 = vmul.f32 %v698, 0.2
      %v731 = vmul.f32 %v699, 0.2
      %v732 = vmul.f32 %v700, 0.2
      %v733 = vmul.f32 %v701, 0.2
      %v734 = vmul.f32 %v702, 0.2
      %v735 = vmul.f32 %v703, 0.2
      %v736 = vmul.f32 %v704, 0.2
      %v737 = vmul.f32 %v705, 0.2
      %v738 = vmul.f32 %v706, 0.2
      %v739 = vmul.f32 %v707, 0.2
      %v740 = vmul.f32 %v708, 0.2
      %v741 = vmul.f32 %v709, 0.2
      %v742 = vsel %vm710, %v694, %v726
      %v743 = vsel %vm711, %v695, %v727
      %v744 = vsel %vm712, %v696, %v728
      %v745 = vsel %vm713, %v697, %v729
      %v746 = vsel %vm714, %v698, %v730
      %v747 = vsel %vm715, %v699, %v731
      %v748 = vsel %vm716, %v700, %v732
      %v749 = vsel %vm717, %v701, %v733
      %v750 = vsel %vm718, %v702, %v734
      %v751 = vsel %vm719, %v703, %v735
      %v752 = vsel %vm720, %v704, %v736
      %v753 = vsel %vm721, %v705, %v737
      %v754 = vsel %vm722, %v706, %v738
      %v755 = vsel %vm723, %v707, %v739
      %v756 = vsel %vm724, %v708, %v740
      %v757 = vsel %vm725, %v709, %v741
      %v758 = vld [vmem:[%s3] sm:$0xff]
      %v759 = vld [vmem:[%s3 + $0x8] sm:$0xff]
      %v760 = vld [vmem:[%s3 + $0x10] sm:$0xff]
      %v761 = vld [vmem:[%s3 + $0x18] sm:$0xff]
      %v762 = vld [vmem:[%s3 + $0x20] sm:$0xff]
      %v763 = vld [vmem:[%s3 + $0x28] sm:$0xff]
      %v764 = vld [vmem:[%s3 + $0x30] sm:$0xff]
      %v765 = vld [vmem:[%s3 + $0x38] sm:$0xff]
      %v766 = vld [vmem:[%s3 + $0x40] sm:$0xff]
      %v767 = vld [vmem:[%s3 + $0x48] sm:$0xff]
      %v768 = vld [vmem:[%s3 + $0x50] sm:$0xff]
      %v769 = vld [vmem:[%s3 + $0x58] sm:$0xff]
      %v770 = vld [vmem:[%s3 + $0x60] sm:$0xff]
      %v771 = vld [vmem:[%s3 + $0x68] sm:$0xff]
      %v772 = vld [vmem:[%s3 + $0x70] sm:$0xff]
      %v773 = vld [vmem:[%s3 + $0x78] sm:$0xff]
      %vm774 = vcmask 523264
      %v776 = vsel %vm774, %v758, 0
      %v779 = vsel %vm774, %v759, 0
      %v782 = vsel %vm774, %v760, 0
      %v785 = vsel %vm774, %v761, 0
      %v788 = vsel %vm774, %v762, 0
      %v791 = vsel %vm774, %v763, 0
      %v794 = vsel %vm774, %v764, 0
      %v797 = vsel %vm774, %v765, 0
      %v800 = vsel %vm774, %v766, 0
      %v803 = vsel %vm774, %v767, 0
      %v806 = vsel %vm774, %v768, 0
      %v809 = vsel %vm774, %v769, 0
      %v812 = vsel %vm774, %v770, 0
      %v815 = vsel %vm774, %v771, 0
      %v818 = vsel %vm774, %v772, 0
      %v821 = vsel %vm774, %v773, 0
      %823 = vmatprep.subr.mxu0 %v743
      %824 = vmatpush1.msra.mxu0 %v742
      %825 = vmatprep.subr.mxu0 %v745
      %826 = vmatpush1.msra.mxu0 %v744
      %827 = vmatprep.subr.mxu0 %v747
      %828 = vmatpush1.msra.mxu0 %v746
      %829 = vmatprep.subr.mxu0 %v749
      %830 = vmatpush1.msra.mxu0 %v748
      %831 = vmatprep.subr.mxu0 %v751
      %832 = vmatpush1.msra.mxu0 %v750
      %833 = vmatprep.subr.mxu0 %v753
      %834 = vmatpush1.msra.mxu0 %v752
      %835 = vmatprep.subr.mxu0 %v755
      %836 = vmatpush1.msra.mxu0 %v754
      %837 = vmatprep.subr.mxu0 %v757
      %838 = vmatpush1.msra.mxu0 %v756
      %839 = vmatprep.subr.mxu0 0.0
      %840 = vmatpush1.msra.mxu0 0.0
      %841 = vmatprep.subr.mxu0 0.0
      %842 = vmatpush1.msra.mxu0 0.0
      %843 = vmatprep.subr.mxu0 0.0
      %844 = vmatpush1.msra.mxu0 0.0
      %845 = vmatprep.subr.mxu0 0.0
      %846 = vmatpush1.msra.mxu0 0.0
      %847 = vmatprep.subr.mxu0 0.0
      %848 = vmatpush1.msra.mxu0 0.0
      %849 = vmatprep.subr.mxu0 0.0
      %850 = vmatpush1.msra.mxu0 0.0
      %851 = vmatprep.subr.mxu0 0.0
      %852 = vmatpush1.msra.mxu0 0.0
      %853 = vmatprep.subr.mxu0 0.0
      %854 = vmatpush1.msra.mxu0 0.0
      %855 = vmatprep.subr.mxu0 0.0
      %856 = vmatpush1.msra.mxu0 0.0
      %857 = vmatprep.subr.mxu0 0.0
      %858 = vmatpush1.msra.mxu0 0.0
      %859 = vmatprep.subr.mxu0 0.0
      %860 = vmatpush1.msra.mxu0 0.0
      %861 = vmatprep.subr.mxu0 0.0
      %862 = vmatpush1.msra.mxu0 0.0
      %863 = vmatprep.subr.mxu0 0.0
      %864 = vmatpush1.msra.mxu0 0.0
      %865 = vmatprep.subr.mxu0 0.0
      %866 = vmatpush1.msra.mxu0 0.0
      %867 = vmatprep.subr.mxu0 0.0
      %868 = vmatpush1.msra.mxu0 0.0
      %869 = vmatprep.subr.mxu0 0.0
      %870 = vmatpush1.msra.mxu0 0.0
      %871 = vmatprep.subr.mxu0 0.0
      %872 = vmatpush1.msra.mxu0 0.0
      %873 = vmatprep.subr.mxu0 0.0
      %874 = vmatpush1.msra.mxu0 0.0
      %875 = vmatprep.subr.mxu0 0.0
      %876 = vmatpush1.msra.mxu0 0.0
      %877 = vmatprep.subr.mxu0 0.0
      %878 = vmatpush1.msra.mxu0 0.0
      %879 = vmatprep.subr.mxu0 0.0
      %880 = vmatpush1.msra.mxu0 0.0
      %881 = vmatprep.subr.mxu0 0.0
      %882 = vmatpush1.msra.mxu0 0.0
      %883 = vmatprep.subr.mxu0 0.0
      %884 = vmatpush1.msra.mxu0 0.0
      %885 = vmatprep.subr.mxu0 0.0
      %886 = vmatpush1.msra.mxu0 0.0
      %887 = vmatprep.mubr.f32.mxu0 0.0
      %888 = vmatmul.mubr.f32.gmra.mrb[0].mxu0 %v776
      %v889 = vpop.f32.mrb[0].mxu0
      %v890 = vadd.f32 0.0, %v889
      %v891 = vpop.f32.mrb[0].mxu0
      %v892 = vadd.f32 0.0, %v891
      %893 = vmatprep.mubr.f32.mxu0 0.0
      %894 = vmatmul.mubr.f32.gmra.mrb[0].mxu0 %v779
      %v895 = vpop.f32.mrb[0].mxu0
      %v896 = vadd.f32 0.0, %v895
      %v897 = vpop.f32.mrb[0].mxu0
      %v898 = vadd.f32 0.0, %v897
      %899 = vmatprep.mubr.f32.mxu0 0.0
      %900 = vmatmul.mubr.f32.gmra.mrb[0].mxu0 %v782
      %v901 = vpop.f32.mrb[0].mxu0
      %v902 = vadd.f32 0.0, %v901
      %v903 = vpop.f32.mrb[0].mxu0
      %v904 = vadd.f32 0.0, %v903
      %905 = vmatprep.mubr.f32.mxu0 0.0
      %906 = vmatmul.mubr.f32.gmra.mrb[0].mxu0 %v785
      %v907 = vpop.f32.mrb[0].mxu0
      %v908 = vadd.f32 0.0, %v907
      %v909 = vpop.f32.mrb[0].mxu0
      %v910 = vadd.f32 0.0, %v909
      %911 = vmatprep.mubr.f32.mxu0 0.0
      %912 = vmatmul.mubr.f32.gmra.mrb[0].mxu0 %v788
      %v913 = vpop.f32.mrb[0].mxu0
      %v914 = vadd.f32 0.0, %v913
      %v915 = vpop.f32.mrb[0].mxu0
      %v916 = vadd.f32 0.0, %v915
      %917 = vmatprep.mubr.f32.mxu0 0.0
      %918 = vmatmul.mubr.f32.gmra.mrb[0].mxu0 %v791
      %v919 = vpop.f32.mrb[0].mxu0
      %v920 = vadd.f32 0.0, %v919
      %v921 = vpop.f32.mrb[0].mxu0
      %v922 = vadd.f32 0.0, %v921
      %923 = vmatprep.mubr.f32.mxu0 0.0
      %924 = vmatmul.mubr.f32.gmra.mrb[0].mxu0 %v794
      %v925 = vpop.f32.mrb[0].mxu0
      %v926 = vadd.f32 0.0, %v925
      %v927 = vpop.f32.mrb[0].mxu0
      %v928 = vadd.f32 0.0, %v927
      %929 = vmatprep.mubr.f32.mxu0 0.0
      %930 = vmatmul.mubr.f32.gmra.mrb[0].mxu0 %v797
      %v931 = vpop.f32.mrb[0].mxu0
      %v932 = vadd.f32 0.0, %v931
      %v933 = vpop.f32.mrb[0].mxu0
      %v934 = vadd.f32 0.0, %v933
      %935 = vmatprep.mubr.f32.mxu0 0.0
      %936 = vmatmul.mubr.f32.gmra.mrb[0].mxu0 %v800
      %v937 = vpop.f32.mrb[0].mxu0
      %v938 = vadd.f32 0.0, %v937
      %v939 = vpop.f32.mrb[0].mxu0
      %v940 = vadd.f32 0.0, %v939
      %941 = vmatprep.mubr.f32.mxu0 0.0
      %942 = vmatmul.mubr.f32.gmra.mrb[0].mxu0 %v803
      %v943 = vpop.f32.mrb[0].mxu0
      %v944 = vadd.f32 0.0, %v943
      %v945 = vpop.f32.mrb[0].mxu0
      %v946 = vadd.f32 0.0, %v945
      %947 = vmatprep.mubr.f32.mxu0 0.0
      %948 = vmatmul.mubr.f32.gmra.mrb[0].mxu0 %v806
      %v949 = vpop.f32.mrb[0].mxu0
      %v950 = vadd.f32 0.0, %v949
      %v951 = vpop.f32.mrb[0].mxu0
      %v952 = vadd.f32 0.0, %v951
      %953 = vmatprep.mubr.f32.mxu0 0.0
      %954 = vmatmul.mubr.f32.gmra.mrb[0].mxu0 %v809
      %v955 = vpop.f32.mrb[0].mxu0
      %v956 = vadd.f32 0.0, %v955
      %v957 = vpop.f32.mrb[0].mxu0
      %v958 = vadd.f32 0.0, %v957
      %959 = vmatprep.mubr.f32.mxu0 0.0
      %960 = vmatmul.mubr.f32.gmra.mrb[0].mxu0 %v812
      %v961 = vpop.f32.mrb[0].mxu0
      %v962 = vadd.f32 0.0, %v961
      %v963 = vpop.f32.mrb[0].mxu0
      %v964 = vadd.f32 0.0, %v963
      %965 = vmatprep.mubr.f32.mxu0 0.0
      %966 = vmatmul.mubr.f32.gmra.mrb[0].mxu0 %v815
      %v967 = vpop.f32.mrb[0].mxu0
      %v968 = vadd.f32 0.0, %v967
      %v969 = vpop.f32.mrb[0].mxu0
      %v970 = vadd.f32 0.0, %v969
      %971 = vmatprep.mubr.f32.mxu0 0.0
      %972 = vmatmul.mubr.f32.gmra.mrb[0].mxu0 %v818
      %v973 = vpop.f32.mrb[0].mxu0
      %v974 = vadd.f32 0.0, %v973
      %v975 = vpop.f32.mrb[0].mxu0
      %v976 = vadd.f32 0.0, %v975
      %977 = vmatprep.mubr.f32.mxu0 0.0
      %978 = vmatmul.mubr.f32.gmra.mrb[0].mxu0 %v821
      %v979 = vpop.f32.mrb[0].mxu0
      %v980 = vadd.f32 0.0, %v979
      %v981 = vpop.f32.mrb[0].mxu0
      %v982 = vadd.f32 0.0, %v981
      %983 = vdwg.mxu0
      %v984 = vld [vmem:[%s4] sm:$0xff]
      %v985 = vld [vmem:[%s4 + $0x8] sm:$0xff]
      %v986 = vld [vmem:[%s4 + $0x10] sm:$0xff]
      %v987 = vld [vmem:[%s4 + $0x18] sm:$0xff]
      %v988 = vld [vmem:[%s4 + $0x20] sm:$0xff]
      %v989 = vld [vmem:[%s4 + $0x28] sm:$0xff]
      %v990 = vld [vmem:[%s4 + $0x30] sm:$0xff]
      %v991 = vld [vmem:[%s4 + $0x38] sm:$0xff]
      %v992 = vld [vmem:[%s4 + $0x40] sm:$0xff]
      %v993 = vld [vmem:[%s4 + $0x48] sm:$0xff]
      %v994 = vld [vmem:[%s4 + $0x50] sm:$0xff]
      %v995 = vld [vmem:[%s4 + $0x58] sm:$0xff]
      %v996 = vld [vmem:[%s4 + $0x60] sm:$0xff]
      %v997 = vld [vmem:[%s4 + $0x68] sm:$0xff]
      %v998 = vld [vmem:[%s4 + $0x70] sm:$0xff]
      %v999 = vld [vmem:[%s4 + $0x78] sm:$0xff]
      %1001 = vset.pattern.permute.xlu0 0
      %1002 = vperm.xlu0 %1001, %v984
      %v1003 = vpop.permute.xlu0 %1002
      %1006 = vset.pattern.permute.xlu0 0
      %1007 = vperm.xlu0 %1006, %v985
      %v1008 = vpop.permute.xlu0 %1007
      %1011 = vset.pattern.permute.xlu0 0
      %1012 = vperm.xlu0 %1011, %v986
      %v1013 = vpop.permute.xlu0 %1012
      %1016 = vset.pattern.permute.xlu0 0
      %1017 = vperm.xlu0 %1016, %v987
      %v1018 = vpop.permute.xlu0 %1017
      %1021 = vset.pattern.permute.xlu0 0
      %1022 = vperm.xlu0 %1021, %v988
      %v1023 = vpop.permute.xlu0 %1022
      %1026 = vset.pattern.permute.xlu0 0
      %1027 = vperm.xlu0 %1026, %v989
      %v1028 = vpop.permute.xlu0 %1027
      %1031 = vset.pattern.permute.xlu0 0
      %1032 = vperm.xlu0 %1031, %v990
      %v1033 = vpop.permute.xlu0 %1032
      %1036 = vset.pattern.permute.xlu0 0
      %1037 = vperm.xlu0 %1036, %v991
      %v1038 = vpop.permute.xlu0 %1037
      %1041 = vset.pattern.permute.xlu0 0
      %1042 = vperm.xlu0 %1041, %v992
      %v1043 = vpop.permute.xlu0 %1042
      %1046 = vset.pattern.permute.xlu0 0
      %1047 = vperm.xlu0 %1046, %v993
      %v1048 = vpop.permute.xlu0 %1047
      %1051 = vset.pattern.permute.xlu0 0
      %1052 = vperm.xlu0 %1051, %v994
      %v1053 = vpop.permute.xlu0 %1052
      %1056 = vset.pattern.permute.xlu0 0
      %1057 = vperm.xlu0 %1056, %v995
      %v1058 = vpop.permute.xlu0 %1057
      %1061 = vset.pattern.permute.xlu0 0
      %1062 = vperm.xlu0 %1061, %v996
      %v1063 = vpop.permute.xlu0 %1062
      %1066 = vset.pattern.permute.xlu0 0
      %1067 = vperm.xlu0 %1066, %v997
      %v1068 = vpop.permute.xlu0 %1067
      %1071 = vset.pattern.permute.xlu0 0
      %1072 = vperm.xlu0 %1071, %v998
      %v1073 = vpop.permute.xlu0 %1072
      %1076 = vset.pattern.permute.xlu0 0
      %1077 = vperm.xlu0 %1076, %v999
      %v1078 = vpop.permute.xlu0 %1077
      %v1080 = vmul.f32 %v890, %v1003
      %v1081 = vmul.f32 %v892, %v1003
      %v1082 = vmul.f32 %v896, %v1008
      %v1083 = vmul.f32 %v898, %v1008
      %v1084 = vmul.f32 %v902, %v1013
      %v1085 = vmul.f32 %v904, %v1013
      %v1086 = vmul.f32 %v908, %v1018
      %v1087 = vmul.f32 %v910, %v1018
      %v1088 = vmul.f32 %v914, %v1023
      %v1089 = vmul.f32 %v916, %v1023
      %v1090 = vmul.f32 %v920, %v1028
      %v1091 = vmul.f32 %v922, %v1028
      %v1092 = vmul.f32 %v926, %v1033
      %v1093 = vmul.f32 %v928, %v1033
      %v1094 = vmul.f32 %v932, %v1038
      %v1095 = vmul.f32 %v934, %v1038
      %v1096 = vmul.f32 %v938, %v1043
      %v1097 = vmul.f32 %v940, %v1043
      %v1098 = vmul.f32 %v944, %v1048
      %v1099 = vmul.f32 %v946, %v1048
      %v1100 = vmul.f32 %v950, %v1053
      %v1101 = vmul.f32 %v952, %v1053
      %v1102 = vmul.f32 %v956, %v1058
      %v1103 = vmul.f32 %v958, %v1058
      %v1104 = vmul.f32 %v962, %v1063
      %v1105 = vmul.f32 %v964, %v1063
      %v1106 = vmul.f32 %v968, %v1068
      %v1107 = vmul.f32 %v970, %v1068
      %v1108 = vmul.f32 %v974, %v1073
      %v1109 = vmul.f32 %v976, %v1073
      %v1110 = vmul.f32 %v980, %v1078
      %v1111 = vmul.f32 %v982, %v1078
      %v1112 = vld [vmem:[%s5] sm:$0xff]
      %v1113 = vld [vmem:[%s5 + $0x8] sm:$0xff]
      %v1114 = vld [vmem:[%s5 + $0x10] sm:$0xff]
      %v1115 = vld [vmem:[%s5 + $0x18] sm:$0xff]
      %v1116 = vld [vmem:[%s5 + $0x20] sm:$0xff]
      %v1117 = vld [vmem:[%s5 + $0x28] sm:$0xff]
      %v1118 = vld [vmem:[%s5 + $0x30] sm:$0xff]
      %v1119 = vld [vmem:[%s5 + $0x38] sm:$0xff]
      %v1120 = vld [vmem:[%s5 + $0x40] sm:$0xff]
      %v1121 = vld [vmem:[%s5 + $0x48] sm:$0xff]
      %v1122 = vld [vmem:[%s5 + $0x50] sm:$0xff]
      %v1123 = vld [vmem:[%s5 + $0x58] sm:$0xff]
      %v1124 = vld [vmem:[%s5 + $0x60] sm:$0xff]
      %v1125 = vld [vmem:[%s5 + $0x68] sm:$0xff]
      %v1126 = vld [vmem:[%s5 + $0x70] sm:$0xff]
      %v1127 = vld [vmem:[%s5 + $0x78] sm:$0xff]
      %1129 = vset.pattern.permute.xlu0 0
      %1130 = vperm.xlu0 %1129, %v1112
      %v1131 = vpop.permute.xlu0 %1130
      %1134 = vset.pattern.permute.xlu0 0
      %1135 = vperm.xlu0 %1134, %v1113
      %v1136 = vpop.permute.xlu0 %1135
      %1139 = vset.pattern.permute.xlu0 0
      %1140 = vperm.xlu0 %1139, %v1114
      %v1141 = vpop.permute.xlu0 %1140
      %1144 = vset.pattern.permute.xlu0 0
      %1145 = vperm.xlu0 %1144, %v1115
      %v1146 = vpop.permute.xlu0 %1145
      %1149 = vset.pattern.permute.xlu0 0
      %1150 = vperm.xlu0 %1149, %v1116
      %v1151 = vpop.permute.xlu0 %1150
      %1154 = vset.pattern.permute.xlu0 0
      %1155 = vperm.xlu0 %1154, %v1117
      %v1156 = vpop.permute.xlu0 %1155
      %1159 = vset.pattern.permute.xlu0 0
      %1160 = vperm.xlu0 %1159, %v1118
      %v1161 = vpop.permute.xlu0 %1160
      %1164 = vset.pattern.permute.xlu0 0
      %1165 = vperm.xlu0 %1164, %v1119
      %v1166 = vpop.permute.xlu0 %1165
      %1169 = vset.pattern.permute.xlu0 0
      %1170 = vperm.xlu0 %1169, %v1120
      %v1171 = vpop.permute.xlu0 %1170
      %1174 = vset.pattern.permute.xlu0 0
      %1175 = vperm.xlu0 %1174, %v1121
      %v1176 = vpop.permute.xlu0 %1175
      %1179 = vset.pattern.permute.xlu0 0
      %1180 = vperm.xlu0 %1179, %v1122
      %v1181 = vpop.permute.xlu0 %1180
      %1184 = vset.pattern.permute.xlu0 0
      %1185 = vperm.xlu0 %1184, %v1123
      %v1186 = vpop.permute.xlu0 %1185
      %1189 = vset.pattern.permute.xlu0 0
      %1190 = vperm.xlu0 %1189, %v1124
      %v1191 = vpop.permute.xlu0 %1190
      %1194 = vset.pattern.permute.xlu0 0
      %1195 = vperm.xlu0 %1194, %v1125
      %v1196 = vpop.permute.xlu0 %1195
      %1199 = vset.pattern.permute.xlu0 0
      %1200 = vperm.xlu0 %1199, %v1126
      %v1201 = vpop.permute.xlu0 %1200
      %1204 = vset.pattern.permute.xlu0 0
      %1205 = vperm.xlu0 %1204, %v1127
      %v1206 = vpop.permute.xlu0 %1205
      %v1208 = vadd.f32 %v1080, %v1131
      %v1209 = vadd.f32 %v1081, %v1131
      %v1210 = vadd.f32 %v1082, %v1136
      %v1211 = vadd.f32 %v1083, %v1136
      %v1212 = vadd.f32 %v1084, %v1141
      %v1213 = vadd.f32 %v1085, %v1141
      %v1214 = vadd.f32 %v1086, %v1146
      %v1215 = vadd.f32 %v1087, %v1146
      %v1216 = vadd.f32 %v1088, %v1151
      %v1217 = vadd.f32 %v1089, %v1151
      %v1218 = vadd.f32 %v1090, %v1156
      %v1219 = vadd.f32 %v1091, %v1156
      %v1220 = vadd.f32 %v1092, %v1161
      %v1221 = vadd.f32 %v1093, %v1161
      %v1222 = vadd.f32 %v1094, %v1166
      %v1223 = vadd.f32 %v1095, %v1166
      %v1224 = vadd.f32 %v1096, %v1171
      %v1225 = vadd.f32 %v1097, %v1171
      %v1226 = vadd.f32 %v1098, %v1176
      %v1227 = vadd.f32 %v1099, %v1176
      %v1228 = vadd.f32 %v1100, %v1181
      %v1229 = vadd.f32 %v1101, %v1181
      %v1230 = vadd.f32 %v1102, %v1186
      %v1231 = vadd.f32 %v1103, %v1186
      %v1232 = vadd.f32 %v1104, %v1191
      %v1233 = vadd.f32 %v1105, %v1191
      %v1234 = vadd.f32 %v1106, %v1196
      %v1235 = vadd.f32 %v1107, %v1196
      %v1236 = vadd.f32 %v1108, %v1201
      %v1237 = vadd.f32 %v1109, %v1201
      %v1238 = vadd.f32 %v1110, %v1206
      %v1239 = vadd.f32 %v1111, %v1206
      %vm1240 = vcmp.ge.f32.partialorder %v1208, 0.0
      %vm1241 = vcmp.ge.f32.partialorder %v1209, 0.0
      %vm1242 = vcmp.ge.f32.partialorder %v1210, 0.0
      %vm1243 = vcmp.ge.f32.partialorder %v1211, 0.0
      %vm1244 = vcmp.ge.f32.partialorder %v1212, 0.0
      %vm1245 = vcmp.ge.f32.partialorder %v1213, 0.0
      %vm1246 = vcmp.ge.f32.partialorder %v1214, 0.0
      %vm1247 = vcmp.ge.f32.partialorder %v1215, 0.0
      %vm1248 = vcmp.ge.f32.partialorder %v1216, 0.0
      %vm1249 = vcmp.ge.f32.partialorder %v1217, 0.0
      %vm1250 = vcmp.ge.f32.partialorder %v1218, 0.0
      %vm1251 = vcmp.ge.f32.partialorder %v1219, 0.0
      %vm1252 = vcmp.ge.f32.partialorder %v1220, 0.0
      %vm1253 = vcmp.ge.f32.partialorder %v1221, 0.0
      %vm1254 = vcmp.ge.f32.partialorder %v1222, 0.0
      %vm1255 = vcmp.ge.f32.partialorder %v1223, 0.0
      %vm1256 = vcmp.ge.f32.partialorder %v1224, 0.0
      %vm1257 = vcmp.ge.f32.partialorder %v1225, 0.0
      %vm1258 = vcmp.ge.f32.partialorder %v1226, 0.0
      %vm1259 = vcmp.ge.f32.partialorder %v1227, 0.0
      %vm1260 = vcmp.ge.f32.partialorder %v1228, 0.0
      %vm1261 = vcmp.ge.f32.partialorder %v1229, 0.0
      %vm1262 = vcmp.ge.f32.partialorder %v1230, 0.0
      %vm1263 = vcmp.ge.f32.partialorder %v1231, 0.0
      %vm1264 = vcmp.ge.f32.partialorder %v1232, 0.0
      %vm1265 = vcmp.ge.f32.partialorder %v1233, 0.0
      %vm1266 = vcmp.ge.f32.partialorder %v1234, 0.0
      %vm1267 = vcmp.ge.f32.partialorder %v1235, 0.0
      %vm1268 = vcmp.ge.f32.partialorder %v1236, 0.0
      %vm1269 = vcmp.ge.f32.partialorder %v1237, 0.0
      %vm1270 = vcmp.ge.f32.partialorder %v1238, 0.0
      %vm1271 = vcmp.ge.f32.partialorder %v1239, 0.0
      %v1272 = vmul.f32 %v1208, 0.2
      %v1273 = vmul.f32 %v1209, 0.2
      %v1274 = vmul.f32 %v1210, 0.2
      %v1275 = vmul.f32 %v1211, 0.2
      %v1276 = vmul.f32 %v1212, 0.2
      %v1277 = vmul.f32 %v1213, 0.2
      %v1278 = vmul.f32 %v1214, 0.2
      %v1279 = vmul.f32 %v1215, 0.2
      %v1280 = vmul.f32 %v1216, 0.2
      %v1281 = vmul.f32 %v1217, 0.2
      %v1282 = vmul.f32 %v1218, 0.2
      %v1283 = vmul.f32 %v1219, 0.2
      %v1284 = vmul.f32 %v1220, 0.2
      %v1285 = vmul.f32 %v1221, 0.2
      %v1286 = vmul.f32 %v1222, 0.2
      %v1287 = vmul.f32 %v1223, 0.2
      %v1288 = vmul.f32 %v1224, 0.2
      %v1289 = vmul.f32 %v1225, 0.2
      %v1290 = vmul.f32 %v1226, 0.2
      %v1291 = vmul.f32 %v1227, 0.2
      %v1292 = vmul.f32 %v1228, 0.2
      %v1293 = vmul.f32 %v1229, 0.2
      %v1294 = vmul.f32 %v1230, 0.2
      %v1295 = vmul.f32 %v1231, 0.2
      %v1296 = vmul.f32 %v1232, 0.2
      %v1297 = vmul.f32 %v1233, 0.2
      %v1298 = vmul.f32 %v1234, 0.2
      %v1299 = vmul.f32 %v1235, 0.2
      %v1300 = vmul.f32 %v1236, 0.2
      %v1301 = vmul.f32 %v1237, 0.2
      %v1302 = vmul.f32 %v1238, 0.2
      %v1303 = vmul.f32 %v1239, 0.2
      %v1304 = vsel %vm1240, %v1208, %v1272
      %v1305 = vsel %vm1241, %v1209, %v1273
      %v1306 = vsel %vm1242, %v1210, %v1274
      %v1307 = vsel %vm1243, %v1211, %v1275
      %v1308 = vsel %vm1244, %v1212, %v1276
      %v1309 = vsel %vm1245, %v1213, %v1277
      %v1310 = vsel %vm1246, %v1214, %v1278
      %v1311 = vsel %vm1247, %v1215, %v1279
      %v1312 = vsel %vm1248, %v1216, %v1280
      %v1313 = vsel %vm1249, %v1217, %v1281
      %v1314 = vsel %vm1250, %v1218, %v1282
      %v1315 = vsel %vm1251, %v1219, %v1283
      %v1316 = vsel %vm1252, %v1220, %v1284
      %v1317 = vsel %vm1253, %v1221, %v1285
      %v1318 = vsel %vm1254, %v1222, %v1286
      %v1319 = vsel %vm1255, %v1223, %v1287
      %v1320 = vsel %vm1256, %v1224, %v1288
      %v1321 = vsel %vm1257, %v1225, %v1289
      %v1322 = vsel %vm1258, %v1226, %v1290
      %v1323 = vsel %vm1259, %v1227, %v1291
      %v1324 = vsel %vm1260, %v1228, %v1292
      %v1325 = vsel %vm1261, %v1229, %v1293
      %v1326 = vsel %vm1262, %v1230, %v1294
      %v1327 = vsel %vm1263, %v1231, %v1295
      %v1328 = vsel %vm1264, %v1232, %v1296
      %v1329 = vsel %vm1265, %v1233, %v1297
      %v1330 = vsel %vm1266, %v1234, %v1298
      %v1331 = vsel %vm1267, %v1235, %v1299
      %v1332 = vsel %vm1268, %v1236, %v1300
      %v1333 = vsel %vm1269, %v1237, %v1301
      %v1334 = vsel %vm1270, %v1238, %v1302
      %v1335 = vsel %vm1271, %v1239, %v1303
      %v1336 = vld [vmem:[%s6] sm:$0xff]
      %v1337 = vld [vmem:[%s6 + $0x8] sm:$0xff]
      %v1338 = vld [vmem:[%s6 + $0x10] sm:$0xff]
      %v1339 = vld [vmem:[%s6 + $0x18] sm:$0xff]
      %v1340 = vld [vmem:[%s6 + $0x20] sm:$0xff]
      %v1341 = vld [vmem:[%s6 + $0x28] sm:$0xff]
      %v1342 = vld [vmem:[%s6 + $0x30] sm:$0xff]
      %v1343 = vld [vmem:[%s6 + $0x38] sm:$0xff]
      %v1344 = vld [vmem:[%s6 + $0x40] sm:$0xff]
      %v1345 = vld [vmem:[%s6 + $0x48] sm:$0xff]
      %v1346 = vld [vmem:[%s6 + $0x50] sm:$0xff]
      %v1347 = vld [vmem:[%s6 + $0x58] sm:$0xff]
      %v1348 = vld [vmem:[%s6 + $0x60] sm:$0xff]
      %v1349 = vld [vmem:[%s6 + $0x68] sm:$0xff]
      %v1350 = vld [vmem:[%s6 + $0x70] sm:$0xff]
      %v1351 = vld [vmem:[%s6 + $0x78] sm:$0xff]
      %1353 = vset.pattern.permute.xlu0 0
      %1354 = vperm.xlu0 %1353, %v1336
      %v1355 = vpop.permute.xlu0 %1354
      %1358 = vset.pattern.permute.xlu0 0
      %1359 = vperm.xlu0 %1358, %v1337
      %v1360 = vpop.permute.xlu0 %1359
      %1363 = vset.pattern.permute.xlu0 0
      %1364 = vperm.xlu0 %1363, %v1338
      %v1365 = vpop.permute.xlu0 %1364
      %1368 = vset.pattern.permute.xlu0 0
      %1369 = vperm.xlu0 %1368, %v1339
      %v1370 = vpop.permute.xlu0 %1369
      %1373 = vset.pattern.permute.xlu0 0
      %1374 = vperm.xlu0 %1373, %v1340
      %v1375 = vpop.permute.xlu0 %1374
      %1378 = vset.pattern.permute.xlu0 0
      %1379 = vperm.xlu0 %1378, %v1341
      %v1380 = vpop.permute.xlu0 %1379
      %1383 = vset.pattern.permute.xlu0 0
      %1384 = vperm.xlu0 %1383, %v1342
      %v1385 = vpop.permute.xlu0 %1384
      %1388 = vset.pattern.permute.xlu0 0
      %1389 = vperm.xlu0 %1388, %v1343
      %v1390 = vpop.permute.xlu0 %1389
      %1393 = vset.pattern.permute.xlu0 0
      %1394 = vperm.xlu0 %1393, %v1344
      %v1395 = vpop.permute.xlu0 %1394
      %1398 = vset.pattern.permute.xlu0 0
      %1399 = vperm.xlu0 %1398, %v1345
      %v1400 = vpop.permute.xlu0 %1399
      %1403 = vset.pattern.permute.xlu0 0
      %1404 = vperm.xlu0 %1403, %v1346
      %v1405 = vpop.permute.xlu0 %1404
      %1408 = vset.pattern.permute.xlu0 0
      %1409 = vperm.xlu0 %1408, %v1347
      %v1410 = vpop.permute.xlu0 %1409
      %1413 = vset.pattern.permute.xlu0 0
      %1414 = vperm.xlu0 %1413, %v1348
      %v1415 = vpop.permute.xlu0 %1414
      %1418 = vset.pattern.permute.xlu0 0
      %1419 = vperm.xlu0 %1418, %v1349
      %v1420 = vpop.permute.xlu0 %1419
      %1423 = vset.pattern.permute.xlu0 0
      %1424 = vperm.xlu0 %1423, %v1350
      %v1425 = vpop.permute.xlu0 %1424
      %1428 = vset.pattern.permute.xlu0 0
      %1429 = vperm.xlu0 %1428, %v1351
      %v1430 = vpop.permute.xlu0 %1429
      %v1432 = vmul.f32 %v1304, %v1355
      %v1433 = vmul.f32 %v1305, %v1355
      %v1434 = vmul.f32 %v1306, %v1360
      %v1435 = vmul.f32 %v1307, %v1360
      %v1436 = vmul.f32 %v1308, %v1365
      %v1437 = vmul.f32 %v1309, %v1365
      %v1438 = vmul.f32 %v1310, %v1370
      %v1439 = vmul.f32 %v1311, %v1370
      %v1440 = vmul.f32 %v1312, %v1375
      %v1441 = vmul.f32 %v1313, %v1375
      %v1442 = vmul.f32 %v1314, %v1380
      %v1443 = vmul.f32 %v1315, %v1380
      %v1444 = vmul.f32 %v1316, %v1385
      %v1445 = vmul.f32 %v1317, %v1385
      %v1446 = vmul.f32 %v1318, %v1390
      %v1447 = vmul.f32 %v1319, %v1390
      %v1448 = vmul.f32 %v1320, %v1395
      %v1449 = vmul.f32 %v1321, %v1395
      %v1450 = vmul.f32 %v1322, %v1400
      %v1451 = vmul.f32 %v1323, %v1400
      %v1452 = vmul.f32 %v1324, %v1405
      %v1453 = vmul.f32 %v1325, %v1405
      %v1454 = vmul.f32 %v1326, %v1410
      %v1455 = vmul.f32 %v1327, %v1410
      %v1456 = vmul.f32 %v1328, %v1415
      %v1457 = vmul.f32 %v1329, %v1415
      %v1458 = vmul.f32 %v1330, %v1420
      %v1459 = vmul.f32 %v1331, %v1420
      %v1460 = vmul.f32 %v1332, %v1425
      %v1461 = vmul.f32 %v1333, %v1425
      %v1462 = vmul.f32 %v1334, %v1430
      %v1463 = vmul.f32 %v1335, %v1430
      %v1464 = vadd.f32 %v1432, %v1434
      %v1465 = vadd.f32 %v1464, %v1436
      %v1466 = vadd.f32 %v1465, %v1438
      %v1467 = vadd.f32 %v1466, %v1440
      %v1468 = vadd.f32 %v1467, %v1442
      %v1469 = vadd.f32 %v1468, %v1444
      %v1470 = vadd.f32 %v1469, %v1446
      %v1471 = vadd.f32 %v1470, %v1448
      %v1472 = vadd.f32 %v1471, %v1450
      %v1473 = vadd.f32 %v1472, %v1452
      %v1474 = vadd.f32 %v1473, %v1454
      %v1475 = vadd.f32 %v1474, %v1456
      %v1476 = vadd.f32 %v1475, %v1458
      %v1477 = vadd.f32 %v1476, %v1460
      %v1478 = vadd.f32 %v1477, %v1462
      %v1479 = vrot.slane %v1478, 4
      %v1480 = vadd.f32 %v1478, %v1479
      %v1481 = vrot.slane %v1480, 2
      %v1482 = vadd.f32 %v1480, %v1481
      %v1483 = vrot.slane %v1482, 1
      %v1484 = vadd.f32 %v1482, %v1483
      %v1485 = vadd.f32 %v1433, %v1435
      %v1486 = vadd.f32 %v1485, %v1437
      %v1487 = vadd.f32 %v1486, %v1439
      %v1488 = vadd.f32 %v1487, %v1441
      %v1489 = vadd.f32 %v1488, %v1443
      %v1490 = vadd.f32 %v1489, %v1445
      %v1491 = vadd.f32 %v1490, %v1447
      %v1492 = vadd.f32 %v1491, %v1449
      %v1493 = vadd.f32 %v1492, %v1451
      %v1494 = vadd.f32 %v1493, %v1453
      %v1495 = vadd.f32 %v1494, %v1455
      %v1496 = vadd.f32 %v1495, %v1457
      %v1497 = vadd.f32 %v1496, %v1459
      %v1498 = vadd.f32 %v1497, %v1461
      %v1499 = vadd.f32 %v1498, %v1463
      %v1500 = vrot.slane %v1499, 4
      %v1501 = vadd.f32 %v1499, %v1500
      %v1502 = vrot.slane %v1501, 2
      %v1503 = vadd.f32 %v1501, %v1502
      %v1504 = vrot.slane %v1503, 1
      %v1505 = vadd.f32 %v1503, %v1504
      %v1508 = vcombine.low %v1484, %v1505
      %v1510 = vunpack.c.l.s4 1966171168
      %v1511 = vunpack.c.0.s8 %v1510
      %v1512 = vlaneseq
      %v1513 = vshrl.u32 %v1512, 7
      %v1514 = vsub.s32 %v1511, %v1513
      %v1515 = vrot.slane %v1508, %v1514
      %v1517 = vunpack.c.l.s4 1966171168
      %v1518 = vunpack.c.0.s8 %v1517
      %v1519 = vlaneseq
      %v1520 = vshrl.u32 %v1519, 7
      %v1521 = vsub.s32 %v1518, %v1520
      %v1522 = vrot.slane %v1515, %v1521
      %v1524 = vlaneseq
      %vm1525 = vcmp.ge.s32.totalorder %v1524, 0
      %vm1526 = vcmp.lt.s32.totalorder %v1524, 256
      %vm1527 = vmand %vm1525, %vm1526
      %1528 = vst.msk [vmem:[%s314] sm:$0x3] %vm1527, %v1522
      %s1529 = smul.u32 2, %s23
      %p1530 = scmp.lt.s32.totalorder %s22, 1
      %s1531 = scalar_select %p1530, %s22, 1
      %p1532 = scmp.lt.s32.totalorder %s1529, 1
      %s1533 = scalar_select %p1532, %s1529, 1
      %s1534 = smul.addr %s1531, 2
      %s1535 = sadd.s32 %s1533, %s1534
      %s1536 = scalar_lea.vmem %s7, %s1535
      // Predicated region
      $region49: #{pixel_discriminator.3} parent=47 // pred_check
        %p1537 = pneg %p204
      $region50: #{pixel_discriminator.3} parent=47 // pred_check_branch
        %1539 = sbr.rel (%p1537) target = $region52
      $region51: #{pixel_discriminator.3} parent=47 // pred_region
        %s1540 = smul.u32 2, %s23
      $region52: #{pixel_discriminator.3} parent=47 // pred_fallthru
        _
    $region48: #{pixel_discriminator.3} parent=5 // pred_fallthru
      _
    %p1541 = scmp.le.s32.totalorder 2, %s13
    // Predicated region
    $region53: #{pixel_discriminator.3} parent=5 // pred_check
      %p1542 = pneg %p1541
    $region54: #{pixel_discriminator.3} parent=5 // pred_check_branch
      %1544 = sbr.rel (%p1542) target = $region56
    $region55: #{pixel_discriminator.3} parent=5 // pred_region
      %s1545 = ssub.s32 %s13, 2
      // Predicated region
      $region57: #{pixel_discriminator.3} parent=55 // pred_check
        %p1546 = pneg %p210
      $region58: #{pixel_discriminator.3} parent=55 // pred_check_branch
        %1548 = sbr.rel (%p1546) target = $region60
      $region59: #{pixel_discriminator.3} parent=55 // pred_region
        %s1549 = smul.u32 2, %s25
        %p1550 = scmp.lt.s32.totalorder %s24, 1
        %s1551 = scalar_select %p1550, %s24, 1
        %p1552 = scmp.lt.s32.totalorder %s1549, 1
        %s1553 = scalar_select %p1552, %s1549, 1
        %s1554 = smul.addr %s1551, 2
        %s1555 = sadd.s32 %s1553, %s1554
        %s1556 = scalar_lea.vmem %s7, %s1555
      $region60: #{pixel_discriminator.3} parent=55 // pred_fallthru
        _
    $region56: #{pixel_discriminator.3} parent=5 // pred_fallthru
      _
  $region6: #{pixel_discriminator.3} parent=0 // loop_footer
    %s17 = sadd.s32 1, %s13
  $region7: #{pixel_discriminator.3} parent=0 // loop_footer_branch
    %12 = sbr.rel target = $region3
  $region8: #{pixel_discriminator.3} parent=0 // loop_exit
    _

// kernel: pixel_discriminator.2
$region0: #{pixel_discriminator.2}
  #allocation0 [shape = 'u32[]', space=smem, size = 0x4, offset = 0x4, fixed_abs, tag = 'smem constant byte address 0x4 - core index']
  #allocation1 [shape = 'u32[144,128]{1,0:T(1,128)}', space=vmem, size = 0x12000, scoped, tag = 'internal scratch']
  %s0 = inlined_call_operand.vmem [shape: f32[2,4,256], index: 0, kind: input, shape index: {}]
  %s1 = inlined_call_operand.vmem [shape: f32[64,4], index: 1, kind: input, shape index: {}]
  %s2 = inlined_call_operand.vmem [shape: f32[64,1], index: 2, kind: input, shape index: {}]
  %s3 = inlined_call_operand.vmem [shape: f32[128,64], index: 3, kind: input, shape index: {}]
  %s4 = inlined_call_operand.vmem [shape: f32[128,256], index: 4, kind: output, shape index: {0}]
  %s5 = inlined_call_operand.vmem [shape: f32[128,256], index: 5, kind: output, shape index: {1}]
  %6 = xla_tuple %s4, %s5
  %s7 = sld [smem:[#allocation0]]
  $region61: #{pixel_discriminator.2} parent=0
    _
  %s9 = ssub.s32 1, %s7
  %s10 = scalar_select 0, %s9, %s7
  loop: start=0, step=1, limit=4
  $region2: #{pixel_discriminator.2} parent=0 // loop_pre_header
    _
  $region3: #{pixel_discriminator.2} parent=0 // loop_header
    %s12 = sphi 0, %s16
    %p13 = scmp.ge.s32.totalorder %s12, 4
    %s19 = sphi 0, %s31
    %s20 = sphi 0, %s27
    %s21 = sphi 0, %s19
    %s22 = sphi 0, %s20
    %s23 = sphi 0, %s21
    %s24 = sphi 0, %s22
    %s36 = sphi 0, %s38
    %s39 = sphi 0, %s36
    %s40 = sphi 0, %s39
    %s56 = sphi 0, %s40
    %s60 = sphi 0, %s60
    %s62 = sphi 0, %s60
    %s63 = sphi 0, %s62
    %s77 = sphi 0, %s63
    %s81 = sphi 0, %s81
    %s83 = sphi 0, %s81
    %s84 = sphi 0, %s83
    %s98 = sphi 0, %s84
    %s102 = sphi 0, %s102
    %s104 = sphi 0, %s102
    %s105 = sphi 0, %s104
    %s119 = sphi 0, %s105
    %s123 = sphi 0, %s123
    %s125 = sphi 0, %s123
    %s126 = sphi 0, %s125
    %s140 = sphi 0, %s126
    %s144 = sphi 0, %s144
    %s146 = sphi 0, %s144
    %s147 = sphi 0, %s146
    %s161 = sphi 0, %s147
  $region4: #{pixel_discriminator.2} parent=0 // loop_header_branch
    %15 = sbr.rel (%p13) target = $region8
  $region5: #{pixel_discriminator.2} parent=0 // loop_body
    %s17 = ssub.s32 %s12, 1
    %s18 = ssub.s32 %s12, 2
    %s25 = sadd.s32 1, %s20
    %p26 = scmp.ge.s32.totalorder %s25, 1
    %s27 = scalar_select %p26, 0, %s25
    %s28 = sadd.s32 1, %s19
    %s29 = scalar_select %p26, %s28, %s19
    %p30 = scmp.ge.s32.totalorder %s29, 2
    %s31 = scalar_select %p30, 0, %s29
    %s32 = ssub.s32 %s19, %s31
    %s33 = ssub.s32 %s20, %s27
    %s34 = sor.u32 %s32, %s33
    %p35 = scmp.eq.s32.totalorder %s34, 0
    %s37 = sadd.s32 %s36, 1
    %s38 = scalar_select %p35, %s36, %s37
    %p41 = pneg %p35
    %p42 = scmp.eq.s32.totalorder %s12, 1
    %p43 = por %p41, %p42
    %p44 = scmp.ne.s32.totalorder %s36, %s39
    %p45 = scmp.eq.s32.totalorder %s12, 0
    %p46 = por %p44, %p45
    %p47 = scmp.ne.s32.totalorder %s36, %s39
    %p48 = scmp.eq.s32.totalorder %s17, 1
    %p49 = por %p47, %p48
    %p50 = scmp.ne.s32.totalorder %s39, %s40
    %p51 = scmp.eq.s32.totalorder %s17, 0
    %p52 = por %p50, %p51
    %p53 = scmp.ne.s32.totalorder %s39, %s40
    %p54 = scmp.eq.s32.totalorder %s18, 1
    %p55 = por %p53, %p54
    %p57 = scmp.ne.s32.totalorder %s40, %s56
    %p58 = scmp.eq.s32.totalorder %s18, 0
    %p59 = por %p57, %p58
    %s61 = sadd.s32 %s60, 1
    %p64 = scmp.eq.s32.totalorder %s12, 1
    %p65 = scmp.ne.s32.totalorder %s60, %s62
    %p66 = scmp.eq.s32.totalorder %s12, 0
    %p67 = por %p65, %p66
    %p68 = scmp.ne.s32.totalorder %s60, %s62
    %p69 = scmp.eq.s32.totalorder %s17, 1
    %p70 = por %p68, %p69
    %p71 = scmp.ne.s32.totalorder %s62, %s63
    %p72 = scmp.eq.s32.totalorder %s17, 0
    %p73 = por %p71, %p72
    %p74 = scmp.ne.s32.totalorder %s62, %s63
    %p75 = scmp.eq.s32.totalorder %s18, 1
    %p76 = por %p74, %p75
    %p78 = scmp.ne.s32.totalorder %s63, %s77
    %p79 = scmp.eq.s32.totalorder %s18, 0
    %p80 = por %p78, %p79
    %s82 = sadd.s32 %s81, 1
    %p85 = scmp.eq.s32.totalorder %s12, 1
    %p86 = scmp.ne.s32.totalorder %s81, %s83
    %p87 = scmp.eq.s32.totalorder %s12, 0
    %p88 = por %p86, %p87
    %p89 = scmp.ne.s32.totalorder %s81, %s83
    %p90 = scmp.eq.s32.totalorder %s17, 1
    %p91 = por %p89, %p90
    %p92 = scmp.ne.s32.totalorder %s83, %s84
    %p93 = scmp.eq.s32.totalorder %s17, 0
    %p94 = por %p92, %p93
    %p95 = scmp.ne.s32.totalorder %s83, %s84
    %p96 = scmp.eq.s32.totalorder %s18, 1
    %p97 = por %p95, %p96
    %p99 = scmp.ne.s32.totalorder %s84, %s98
    %p100 = scmp.eq.s32.totalorder %s18, 0
    %p101 = por %p99, %p100
    %s103 = sadd.s32 %s102, 1
    %p106 = scmp.eq.s32.totalorder %s12, 1
    %p107 = scmp.ne.s32.totalorder %s102, %s104
    %p108 = scmp.eq.s32.totalorder %s12, 0
    %p109 = por %p107, %p108
    %p110 = scmp.ne.s32.totalorder %s102, %s104
    %p111 = scmp.eq.s32.totalorder %s17, 1
    %p112 = por %p110, %p111
    %p113 = scmp.ne.s32.totalorder %s104, %s105
    %p114 = scmp.eq.s32.totalorder %s17, 0
    %p115 = por %p113, %p114
    %p116 = scmp.ne.s32.totalorder %s104, %s105
    %p117 = scmp.eq.s32.totalorder %s18, 1
    %p118 = por %p116, %p117
    %p120 = scmp.ne.s32.totalorder %s105, %s119
    %p121 = scmp.eq.s32.totalorder %s18, 0
    %p122 = por %p120, %p121
    %s124 = sadd.s32 %s123, 1
    %p127 = scmp.eq.s32.totalorder %s12, 1
    %p128 = scmp.ne.s32.totalorder %s123, %s125
    %p129 = scmp.eq.s32.totalorder %s12, 0
    %p130 = por %p128, %p129
    %p131 = scmp.ne.s32.totalorder %s123, %s125
    %p132 = scmp.eq.s32.totalorder %s17, 1
    %p133 = por %p131, %p132
    %p134 = scmp.ne.s32.totalorder %s125, %s126
    %p135 = scmp.eq.s32.totalorder %s17, 0
    %p136 = por %p134, %p135
    %p137 = scmp.ne.s32.totalorder %s125, %s126
    %p138 = scmp.eq.s32.totalorder %s18, 1
    %p139 = por %p137, %p138
    %p141 = scmp.ne.s32.totalorder %s126, %s140
    %p142 = scmp.eq.s32.totalorder %s18, 0
    %p143 = por %p141, %p142
    %s145 = sadd.s32 %s144, 1
    %p148 = scmp.eq.s32.totalorder %s12, 1
    %p149 = scmp.ne.s32.totalorder %s144, %s146
    %p150 = scmp.eq.s32.totalorder %s12, 0
    %p151 = por %p149, %p150
    %p152 = scmp.ne.s32.totalorder %s144, %s146
    %p153 = scmp.eq.s32.totalorder %s17, 1
    %p154 = por %p152, %p153
    %p155 = scmp.ne.s32.totalorder %s146, %s147
    %p156 = scmp.eq.s32.totalorder %s17, 0
    %p157 = por %p155, %p156
    %p158 = scmp.ne.s32.totalorder %s146, %s147
    %p159 = scmp.eq.s32.totalorder %s18, 1
    %p160 = por %p158, %p159
    %p162 = scmp.ne.s32.totalorder %s147, %s161
    %p163 = scmp.eq.s32.totalorder %s18, 0
    %p164 = por %p162, %p163
    %p165 = scmp.le.s32.totalorder 1, %s12
    %p166 = scmp.lt.s32.totalorder %s12, 3
    %p167 = pnand %p165, %p166
    %p168 = pneg %p167
    // Predicated region
    $region9: #{pixel_discriminator.2} parent=5 // pred_check
      _
    $region10: #{pixel_discriminator.2} parent=5 // pred_check_branch
      %170 = sbr.rel (%p167) target = $region12
    $region11: #{pixel_discriminator.2} parent=5 // pred_region
      %s171 = ssub.s32 %s12, 1
      // Predicated region
      $region13: #{pixel_discriminator.2} parent=11 // pred_check
        %p172 = pneg %p73
      $region14: #{pixel_discriminator.2} parent=11 // pred_check_branch
        %174 = sbr.rel (%p172) target = $region16
      $region15: #{pixel_discriminator.2} parent=11 // pred_region
        _
      $region16: #{pixel_discriminator.2} parent=11 // pred_fallthru
        _
      // Predicated region
      $region17: #{pixel_discriminator.2} parent=11 // pred_check
        %p175 = pneg %p94
      $region18: #{pixel_discriminator.2} parent=11 // pred_check_branch
        %177 = sbr.rel (%p175) target = $region20
      $region19: #{pixel_discriminator.2} parent=11 // pred_region
        _
      $region20: #{pixel_discriminator.2} parent=11 // pred_fallthru
        _
      // Predicated region
      $region21: #{pixel_discriminator.2} parent=11 // pred_check
        %p178 = pneg %p115
      $region22: #{pixel_discriminator.2} parent=11 // pred_check_branch
        %180 = sbr.rel (%p178) target = $region24
      $region23: #{pixel_discriminator.2} parent=11 // pred_region
        _
      $region24: #{pixel_discriminator.2} parent=11 // pred_fallthru
        _
    $region12: #{pixel_discriminator.2} parent=5 // pred_fallthru
      _
    %p181 = scmp.lt.s32.totalorder %s12, 2
    // Predicated region
    $region25: #{pixel_discriminator.2} parent=5 // pred_check
      %p182 = pneg %p181
    $region26: #{pixel_discriminator.2} parent=5 // pred_check_branch
      %184 = sbr.rel (%p182) target = $region28
    $region27: #{pixel_discriminator.2} parent=5 // pred_region
      // Predicated region
      $region29: #{pixel_discriminator.2} parent=27 // pred_check
        %p185 = pneg %p46
      $region30: #{pixel_discriminator.2} parent=27 // pred_check_branch
        %187 = sbr.rel (%p185) target = $region32
      $region31: #{pixel_discriminator.2} parent=27 // pred_region
        %s188 = smul.u32 2, %s20
        %p189 = scmp.lt.s32.totalorder %s19, 1
        %s190 = scalar_select %p189, %s19, 1
        %p191 = scmp.lt.s32.totalorder %s188, 1
        %s192 = scalar_select %p191, %s188, 1
        %s193 = smul.addr %s190, 2
        %s194 = sadd.s32 %s192, %s193
        %s195 = smul.addr %s194, 4
        %s196 = scalar_lea.vmem %s0, %s195
        %s197 = smul.u32 2, %s20
      $region32: #{pixel_discriminator.2} parent=27 // pred_fallthru
        _
    $region28: #{pixel_discriminator.2} parent=5 // pred_fallthru
      _
    %p198 = scmp.le.s32.totalorder 1, %s12
    %p199 = scmp.lt.s32.totalorder %s12, 3
    %p200 = pnand %p198, %p199
    %p201 = pneg %p200
    // Predicated region
    $region33: #{pixel_discriminator.2} parent=5 // pred_check
      _
    $region34: #{pixel_discriminator.2} parent=5 // pred_check_branch
      %203 = sbr.rel (%p200) target = $region36
    $region35: #{pixel_discriminator.2} parent=5 // pred_region
      %s204 = ssub.s32 %s12, 1
      %s205 = smul.u32 2, %s22
      %p206 = scmp.lt.s32.totalorder %s21, 1
      %s207 = scalar_select %p206, %s21, 1
      %p208 = scmp.lt.s32.totalorder %s205, 1
      %s209 = scalar_select %p208, %s205, 1
      %s210 = smul.addr %s207, 2
      %s211 = sadd.s32 %s209, %s210
      %s212 = smul.addr %s211, 4
      %s213 = scalar_lea.vmem %s0, %s212
      %p214 = pneg %p52
      %p215 = pneg %p49
      %p216 = pneg %p73
      %p217 = pneg %p70
      %p218 = pneg %p94
      %p219 = pneg %p91
      %p220 = pneg %p115
      %p221 = pneg %p112
      %p222 = pneg %p136
      %p223 = pneg %p133
      %p224 = pneg %p157
      %p225 = pneg %p154
      %s226 = smul.u32 2, %s22
      %p227 = scmp.lt.s32.totalorder %s21, 1
      %s228 = scalar_select %p227, %s21, 1
      %p229 = scmp.lt.s32.totalorder %s226, 1
      %s230 = scalar_select %p229, %s226, 1
      %s231 = smul.addr %s228, 2
      %s232 = sadd.s32 %s230, %s231
      %s233 = smul.addr %s232, 4
      %s234 = scalar_lea.vmem %s0, %s233
      %s235 = smul.u32 2, %s22
      %p236 = scmp.eq.s32.totalorder %s21, 0
      %p237 = scmp.eq.s32.totalorder %s22, 0
      %p238 = pnand %p236, %p237
      %p239 = pneg %p238
      // Predicated region
      $region37: #{pixel_discriminator.2} parent=35 // pred_check
        _
      $region38: #{pixel_discriminator.2} parent=35 // pred_check_branch
        %241 = sbr.rel (%p238) target = $region40
      $region39: #{pixel_discriminator.2} parent=35 // pred_region
        %242 = vst [vmem:[%s4] sm:$0xff] 0.0
        %243 = vst [vmem:[%s4 + $0x8] sm:$0xff] 0.0
        %244 = vst [vmem:[%s4 + $0x10] sm:$0xff] 0.0
        %245 = vst [vmem:[%s4 + $0x18] sm:$0xff] 0.0
        %246 = vst [vmem:[%s4 + $0x20] sm:$0xff] 0.0
        %247 = vst [vmem:[%s4 + $0x28] sm:$0xff] 0.0
        %248 = vst [vmem:[%s4 + $0x30] sm:$0xff] 0.0
        %249 = vst [vmem:[%s4 + $0x38] sm:$0xff] 0.0
        %250 = vst [vmem:[%s4 + $0x40] sm:$0xff] 0.0
        %251 = vst [vmem:[%s4 + $0x48] sm:$0xff] 0.0
        %252 = vst [vmem:[%s4 + $0x50] sm:$0xff] 0.0
        %253 = vst [vmem:[%s4 + $0x58] sm:$0xff] 0.0
        %254 = vst [vmem:[%s4 + $0x60] sm:$0xff] 0.0
        %255 = vst [vmem:[%s4 + $0x68] sm:$0xff] 0.0
        %256 = vst [vmem:[%s4 + $0x70] sm:$0xff] 0.0
        %257 = vst [vmem:[%s4 + $0x78] sm:$0xff] 0.0
        %258 = vst [vmem:[%s4 + $0x80] sm:$0xff] 0.0
        %259 = vst [vmem:[%s4 + $0x88] sm:$0xff] 0.0
        %260 = vst [vmem:[%s4 + $0x90] sm:$0xff] 0.0
        %261 = vst [vmem:[%s4 + $0x98] sm:$0xff] 0.0
        %262 = vst [vmem:[%s4 + $0xa0] sm:$0xff] 0.0
        %263 = vst [vmem:[%s4 + $0xa8] sm:$0xff] 0.0
        %264 = vst [vmem:[%s4 + $0xb0] sm:$0xff] 0.0
        %265 = vst [vmem:[%s4 + $0xb8] sm:$0xff] 0.0
        %266 = vst [vmem:[%s4 + $0xc0] sm:$0xff] 0.0
        %267 = vst [vmem:[%s4 + $0xc8] sm:$0xff] 0.0
        %268 = vst [vmem:[%s4 + $0xd0] sm:$0xff] 0.0
        %269 = vst [vmem:[%s4 + $0xd8] sm:$0xff] 0.0
        %270 = vst [vmem:[%s4 + $0xe0] sm:$0xff] 0.0
        %271 = vst [vmem:[%s4 + $0xe8] sm:$0xff] 0.0
        %272 = vst [vmem:[%s4 + $0xf0] sm:$0xff] 0.0
        %273 = vst [vmem:[%s4 + $0xf8] sm:$0xff] 0.0
        %274 = vst [vmem:[%s5] sm:$0xff] 0.0
        %275 = vst [vmem:[%s5 + $0x8] sm:$0xff] 0.0
        %276 = vst [vmem:[%s5 + $0x10] sm:$0xff] 0.0
        %277 = vst [vmem:[%s5 + $0x18] sm:$0xff] 0.0
        %278 = vst [vmem:[%s5 + $0x20] sm:$0xff] 0.0
        %279 = vst [vmem:[%s5 + $0x28] sm:$0xff] 0.0
        %280 = vst [vmem:[%s5 + $0x30] sm:$0xff] 0.0
        %281 = vst [vmem:[%s5 + $0x38] sm:$0xff] 0.0
        %282 = vst [vmem:[%s5 + $0x40] sm:$0xff] 0.0
        %283 = vst [vmem:[%s5 + $0x48] sm:$0xff] 0.0
        %284 = vst [vmem:[%s5 + $0x50] sm:$0xff] 0.0
        %285 = vst [vmem:[%s5 + $0x58] sm:$0xff] 0.0
        %286 = vst [vmem:[%s5 + $0x60] sm:$0xff] 0.0
        %287 = vst [vmem:[%s5 + $0x68] sm:$0xff] 0.0
        %288 = vst [vmem:[%s5 + $0x70] sm:$0xff] 0.0
        %289 = vst [vmem:[%s5 + $0x78] sm:$0xff] 0.0
        %290 = vst [vmem:[%s5 + $0x80] sm:$0xff] 0.0
        %291 = vst [vmem:[%s5 + $0x88] sm:$0xff] 0.0
        %292 = vst [vmem:[%s5 + $0x90] sm:$0xff] 0.0
        %293 = vst [vmem:[%s5 + $0x98] sm:$0xff] 0.0
        %294 = vst [vmem:[%s5 + $0xa0] sm:$0xff] 0.0
        %295 = vst [vmem:[%s5 + $0xa8] sm:$0xff] 0.0
        %296 = vst [vmem:[%s5 + $0xb0] sm:$0xff] 0.0
        %297 = vst [vmem:[%s5 + $0xb8] sm:$0xff] 0.0
        %298 = vst [vmem:[%s5 + $0xc0] sm:$0xff] 0.0
        %299 = vst [vmem:[%s5 + $0xc8] sm:$0xff] 0.0
        %300 = vst [vmem:[%s5 + $0xd0] sm:$0xff] 0.0
        %301 = vst [vmem:[%s5 + $0xd8] sm:$0xff] 0.0
        %302 = vst [vmem:[%s5 + $0xe0] sm:$0xff] 0.0
        %303 = vst [vmem:[%s5 + $0xe8] sm:$0xff] 0.0
        %304 = vst [vmem:[%s5 + $0xf0] sm:$0xff] 0.0
        %305 = vst [vmem:[%s5 + $0xf8] sm:$0xff] 0.0
      $region40: #{pixel_discriminator.2} parent=35 // pred_fallthru
        _
      %v306 = vld [vmem:[%s234] sm:$0xff]
      %v307 = vld [vmem:[%s1] sm:$0xff]
      %v308 = vld [vmem:[%s1 + $0x8] sm:$0xff]
      %v309 = vld [vmem:[%s1 + $0x10] sm:$0xff]
      %v310 = vld [vmem:[%s1 + $0x18] sm:$0xff]
      %v311 = vld [vmem:[%s1 + $0x20] sm:$0xff]
      %v312 = vld [vmem:[%s1 + $0x28] sm:$0xff]
      %v313 = vld [vmem:[%s1 + $0x30] sm:$0xff]
      %v314 = vld [vmem:[%s1 + $0x38] sm:$0xff]
      %v315 = vld [vmem:[%s2] sm:$0xff]
      %v316 = vld [vmem:[%s2 + $0x8] sm:$0xff]
      %v317 = vld [vmem:[%s2 + $0x10] sm:$0xff]
      %v318 = vld [vmem:[%s2 + $0x18] sm:$0xff]
      %v319 = vld [vmem:[%s2 + $0x20] sm:$0xff]
      %v320 = vld [vmem:[%s2 + $0x28] sm:$0xff]
      %v321 = vld [vmem:[%s2 + $0x30] sm:$0xff]
      %v322 = vld [vmem:[%s2 + $0x38] sm:$0xff]
      %v324 = vlaneseq
      %v325 = vshrl.u32 %v324, 7
      %v326 = vsub.s32 0, %v325
      %v327 = vrot.slane %v306, %v326
      %v328 = vlaneseq
      %v329 = vshrl.u32 %v328, 7
      %v330 = vsub.s32 4, %v329
      %v331 = vrot.slane %v306, %v330
      %v334 = vlaneseq
      %v335 = vshrl.u32 %v334, 7
      %v336 = vsub.s32 0, %v335
      %v337 = vrot.slane %v327, %v336
      %v338 = vlaneseq
      %v339 = vshrl.u32 %v338, 7
      %v340 = vsub.s32 0, %v339
      %v341 = vrot.slane %v331, %v340
      %343 = vset.pattern.permute.xlu0 0
      %344 = vperm.xlu0 %343, %v307
      %v345 = vpop.permute.xlu0 %344
      %348 = vset.pattern.permute.xlu0 0
      %349 = vperm.xlu0 %348, %v308
      %v350 = vpop.permute.xlu0 %349
      %353 = vset.pattern.permute.xlu0 0
      %354 = vperm.xlu0 %353, %v309
      %v355 = vpop.permute.xlu0 %354
      %358 = vset.pattern.permute.xlu0 0
      %359 = vperm.xlu0 %358, %v310
      %v360 = vpop.permute.xlu0 %359
      %363 = vset.pattern.permute.xlu0 0
      %364 = vperm.xlu0 %363, %v311
      %v365 = vpop.permute.xlu0 %364
      %368 = vset.pattern.permute.xlu0 0
      %369 = vperm.xlu0 %368, %v312
      %v370 = vpop.permute.xlu0 %369
      %373 = vset.pattern.permute.xlu0 0
      %374 = vperm.xlu0 %373, %v313
      %v375 = vpop.permute.xlu0 %374
      %378 = vset.pattern.permute.xlu0 0
      %379 = vperm.xlu0 %378, %v314
      %v380 = vpop.permute.xlu0 %379
      %v382 = vmul.f32 %v337, %v345
      %v383 = vmul.f32 %v341, %v345
      %v384 = vmul.f32 %v337, %v350
      %v385 = vmul.f32 %v341, %v350
      %v386 = vmul.f32 %v337, %v355
      %v387 = vmul.f32 %v341, %v355
      %v388 = vmul.f32 %v337, %v360
      %v389 = vmul.f32 %v341, %v360
      %v390 = vmul.f32 %v337, %v365
      %v391 = vmul.f32 %v341, %v365
      %v392 = vmul.f32 %v337, %v370
      %v393 = vmul.f32 %v341, %v370
      %v394 = vmul.f32 %v337, %v375
      %v395 = vmul.f32 %v341, %v375
      %v396 = vmul.f32 %v337, %v380
      %v397 = vmul.f32 %v341, %v380
      %v398 = vlaneseq
      %v399 = vshrl.u32 %v398, 7
      %v400 = vsub.s32 1, %v399
      %v401 = vrot.slane %v306, %v400
      %v402 = vlaneseq
      %v403 = vshrl.u32 %v402, 7
      %v404 = vsub.s32 5, %v403
      %v405 = vrot.slane %v306, %v404
      %v408 = vlaneseq
      %v409 = vshrl.u32 %v408, 7
      %v410 = vsub.s32 1, %v409
      %v411 = vrot.slane %v401, %v410
      %v412 = vlaneseq
      %v413 = vshrl.u32 %v412, 7
      %v414 = vsub.s32 1, %v413
      %v415 = vrot.slane %v405, %v414
      %416 = vset.pattern.permute.xlu0 1
      %417 = vperm.xlu0 %416, %v307
      %v418 = vpop.permute.xlu0 %417
      %420 = vset.pattern.permute.xlu0 1
      %421 = vperm.xlu0 %420, %v308
      %v422 = vpop.permute.xlu0 %421
      %424 = vset.pattern.permute.xlu0 1
      %425 = vperm.xlu0 %424, %v309
      %v426 = vpop.permute.xlu0 %425
      %428 = vset.pattern.permute.xlu0 1
      %429 = vperm.xlu0 %428, %v310
      %v430 = vpop.permute.xlu0 %429
      %432 = vset.pattern.permute.xlu0 1
      %433 = vperm.xlu0 %432, %v311
      %v434 = vpop.permute.xlu0 %433
      %436 = vset.pattern.permute.xlu0 1
      %437 = vperm.xlu0 %436, %v312
      %v438 = vpop.permute.xlu0 %437
      %440 = vset.pattern.permute.xlu0 1
      %441 = vperm.xlu0 %440, %v313
      %v442 = vpop.permute.xlu0 %441
      %444 = vset.pattern.permute.xlu0 1
      %445 = vperm.xlu0 %444, %v314
      %v446 = vpop.permute.xlu0 %445
      %v448 = vmul.f32 %v411, %v418
      %v449 = vmul.f32 %v415, %v418
      %v450 = vmul.f32 %v411, %v422
      %v451 = vmul.f32 %v415, %v422
      %v452 = vmul.f32 %v411, %v426
      %v453 = vmul.f32 %v415, %v426
      %v454 = vmul.f32 %v411, %v430
      %v455 = vmul.f32 %v415, %v430
      %v456 = vmul.f32 %v411, %v434
      %v457 = vmul.f32 %v415, %v434
      %v458 = vmul.f32 %v411, %v438
      %v459 = vmul.f32 %v415, %v438
      %v460 = vmul.f32 %v411, %v442
      %v461 = vmul.f32 %v415, %v442
      %v462 = vmul.f32 %v411, %v446
      %v463 = vmul.f32 %v415, %v446
      %v464 = vadd.f32 %v382, %v448
      %v465 = vadd.f32 %v383, %v449
      %v466 = vadd.f32 %v384, %v450
      %v467 = vadd.f32 %v385, %v451
      %v468 = vadd.f32 %v386, %v452
      %v469 = vadd.f32 %v387, %v453
      %v470 = vadd.f32 %v388, %v454
      %v471 = vadd.f32 %v389, %v455
      %v472 = vadd.f32 %v390, %v456
      %v473 = vadd.f32 %v391, %v457
      %v474 = vadd.f32 %v392, %v458
      %v475 = vadd.f32 %v393, %v459
      %v476 = vadd.f32 %v394, %v460
      %v477 = vadd.f32 %v395, %v461
      %v478 = vadd.f32 %v396, %v462
      %v479 = vadd.f32 %v397, %v463
      %v480 = vlaneseq
      %v481 = vshrl.u32 %v480, 7
      %v482 = vsub.s32 2, %v481
      %v483 = vrot.slane %v306, %v482
      %v484 = vlaneseq
      %v485 = vshrl.u32 %v484, 7
      %v486 = vsub.s32 6, %v485
      %v487 = vrot.slane %v306, %v486
      %v490 = vlaneseq
      %v491 = vshrl.u32 %v490, 7
      %v492 = vsub.s32 2, %v491
      %v493 = vrot.slane %v483, %v492
      %v494 = vlaneseq
      %v495 = vshrl.u32 %v494, 7
      %v496 = vsub.s32 2, %v495
      %v497 = vrot.slane %v487, %v496
      %498 = vset.pattern.permute.xlu0 2
      %499 = vperm.xlu0 %498, %v307
      %v500 = vpop.permute.xlu0 %499
      %502 = vset.pattern.permute.xlu0 2
      %503 = vperm.xlu0 %502, %v308
      %v504 = vpop.permute.xlu0 %503
      %506 = vset.pattern.permute.xlu0 2
      %507 = vperm.xlu0 %506, %v309
      %v508 = vpop.permute.xlu0 %507
      %510 = vset.pattern.permute.xlu0 2
      %511 = vperm.xlu0 %510, %v310
      %v512 = vpop.permute.xlu0 %511
      %514 = vset.pattern.permute.xlu0 2
      %515 = vperm.xlu0 %514, %v311
      %v516 = vpop.permute.xlu0 %515
      %518 = vset.pattern.permute.xlu0 2
      %519 = vperm.xlu0 %518, %v312
      %v520 = vpop.permute.xlu0 %519
      %522 = vset.pattern.permute.xlu0 2
      %523 = vperm.xlu0 %522, %v313
      %v524 = vpop.permute.xlu0 %523
      %526 = vset.pattern.permute.xlu0 2
      %527 = vperm.xlu0 %526, %v314
      %v528 = vpop.permute.xlu0 %527
      %v530 = vmul.f32 %v493, %v500
      %v531 = vmul.f32 %v497, %v500
      %v532 = vmul.f32 %v493, %v504
      %v533 = vmul.f32 %v497, %v504
      %v534 = vmul.f32 %v493, %v508
      %v535 = vmul.f32 %v497, %v508
      %v536 = vmul.f32 %v493, %v512
      %v537 = vmul.f32 %v497, %v512
      %v538 = vmul.f32 %v493, %v516
      %v539 = vmul.f32 %v497, %v516
      %v540 = vmul.f32 %v493, %v520
      %v541 = vmul.f32 %v497, %v520
      %v542 = vmul.f32 %v493, %v524
      %v543 = vmul.f32 %v497, %v524
      %v544 = vmul.f32 %v493, %v528
      %v545 = vmul.f32 %v497, %v528
      %v546 = vadd.f32 %v464, %v530
      %v547 = vadd.f32 %v465, %v531
      %v548 = vadd.f32 %v466, %v532
      %v549 = vadd.f32 %v467, %v533
      %v550 = vadd.f32 %v468, %v534
      %v551 = vadd.f32 %v469, %v535
      %v552 = vadd.f32 %v470, %v536
      %v553 = vadd.f32 %v471, %v537
      %v554 = vadd.f32 %v472, %v538
      %v555 = vadd.f32 %v473, %v539
      %v556 = vadd.f32 %v474, %v540
      %v557 = vadd.f32 %v475, %v541
      %v558 = vadd.f32 %v476, %v542
      %v559 = vadd.f32 %v477, %v543
      %v560 = vadd.f32 %v478, %v544
      %v561 = vadd.f32 %v479, %v545
      %v562 = vlaneseq
      %v563 = vshrl.u32 %v562, 7
      %v564 = vsub.s32 3, %v563
      %v565 = vrot.slane %v306, %v564
      %v566 = vlaneseq
      %v567 = vshrl.u32 %v566, 7
      %v568 = vsub.s32 7, %v567
      %v569 = vrot.slane %v306, %v568
      %v572 = vlaneseq
      %v573 = vshrl.u32 %v572, 7
      %v574 = vsub.s32 3, %v573
      %v575 = vrot.slane %v565, %v574
      %v576 = vlaneseq
      %v577 = vshrl.u32 %v576, 7
      %v578 = vsub.s32 3, %v577
      %v579 = vrot.slane %v569, %v578
      %580 = vset.pattern.permute.xlu0 3
      %581 = vperm.xlu0 %580, %v307
      %v582 = vpop.permute.xlu0 %581
      %584 = vset.pattern.permute.xlu0 3
      %585 = vperm.xlu0 %584, %v308
      %v586 = vpop.permute.xlu0 %585
      %588 = vset.pattern.permute.xlu0 3
      %589 = vperm.xlu0 %588, %v309
      %v590 = vpop.permute.xlu0 %589
      %592 = vset.pattern.permute.xlu0 3
      %593 = vperm.xlu0 %592, %v310
      %v594 = vpop.permute.xlu0 %593
      %596 = vset.pattern.permute.xlu0 3
      %597 = vperm.xlu0 %596, %v311
      %v598 = vpop.permute.xlu0 %597
      %600 = vset.pattern.permute.xlu0 3
      %601 = vperm.xlu0 %600, %v312
      %v602 = vpop.permute.xlu0 %601
      %604 = vset.pattern.permute.xlu0 3
      %605 = vperm.xlu0 %604, %v313
      %v606 = vpop.permute.xlu0 %605
      %608 = vset.pattern.permute.xlu0 3
      %609 = vperm.xlu0 %608, %v314
      %v610 = vpop.permute.xlu0 %609
      %v612 = vmul.f32 %v575, %v582
      %v613 = vmul.f32 %v579, %v582
      %v614 = vmul.f32 %v575, %v586
      %v615 = vmul.f32 %v579, %v586
      %v616 = vmul.f32 %v575, %v590
      %v617 = vmul.f32 %v579, %v590
      %v618 = vmul.f32 %v575, %v594
      %v619 = vmul.f32 %v579, %v594
      %v620 = vmul.f32 %v575, %v598
      %v621 = vmul.f32 %v579, %v598
      %v622 = vmul.f32 %v575, %v602
      %v623 = vmul.f32 %v579, %v602
      %v624 = vmul.f32 %v575, %v606
      %v625 = vmul.f32 %v579, %v606
      %v626 = vmul.f32 %v575, %v610
      %v627 = vmul.f32 %v579, %v610
      %v628 = vadd.f32 %v546, %v612
      %v629 = vadd.f32 %v547, %v613
      %v630 = vadd.f32 %v548, %v614
      %v631 = vadd.f32 %v549, %v615
      %v632 = vadd.f32 %v550, %v616
      %v633 = vadd.f32 %v551, %v617
      %v634 = vadd.f32 %v552, %v618
      %v635 = vadd.f32 %v553, %v619
      %v636 = vadd.f32 %v554, %v620
      %v637 = vadd.f32 %v555, %v621
      %v638 = vadd.f32 %v556, %v622
      %v639 = vadd.f32 %v557, %v623
      %v640 = vadd.f32 %v558, %v624
      %v641 = vadd.f32 %v559, %v625
      %v642 = vadd.f32 %v560, %v626
      %v643 = vadd.f32 %v561, %v627
      %645 = vset.pattern.permute.xlu0 0
      %646 = vperm.xlu0 %645, %v315
      %v647 = vpop.permute.xlu0 %646
      %650 = vset.pattern.permute.xlu0 0
      %651 = vperm.xlu0 %650, %v316
      %v652 = vpop.permute.xlu0 %651
      %655 = vset.pattern.permute.xlu0 0
      %656 = vperm.xlu0 %655, %v317
      %v657 = vpop.permute.xlu0 %656
      %660 = vset.pattern.permute.xlu0 0
      %661 = vperm.xlu0 %660, %v318
      %v662 = vpop.permute.xlu0 %661
      %665 = vset.pattern.permute.xlu0 0
      %666 = vperm.xlu0 %665, %v319
      %v667 = vpop.permute.xlu0 %666
      %670 = vset.pattern.permute.xlu0 0
      %671 = vperm.xlu0 %670, %v320
      %v672 = vpop.permute.xlu0 %671
      %675 = vset.pattern.permute.xlu0 0
      %676 = vperm.xlu0 %675, %v321
      %v677 = vpop.permute.xlu0 %676
      %680 = vset.pattern.permute.xlu0 0
      %681 = vperm.xlu0 %680, %v322
      %v682 = vpop.permute.xlu0 %681
      %v684 = vadd.f32 %v628, %v647
      %v685 = vadd.f32 %v629, %v647
      %v686 = vadd.f32 %v630, %v652
      %v687 = vadd.f32 %v631, %v652
      %v688 = vadd.f32 %v632, %v657
      %v689 = vadd.f32 %v633, %v657
      %v690 = vadd.f32 %v634, %v662
      %v691 = vadd.f32 %v635, %v662
      %v692 = vadd.f32 %v636, %v667
      %v693 = vadd.f32 %v637, %v667
      %v694 = vadd.f32 %v638, %v672
      %v695 = vadd.f32 %v639, %v672
      %v696 = vadd.f32 %v640, %v677
      %v697 = vadd.f32 %v641, %v677
      %v698 = vadd.f32 %v642, %v682
      %v699 = vadd.f32 %v643, %v682
      %vm700 = vcmp.ge.f32.partialorder %v684, 0.0
      %vm701 = vcmp.ge.f32.partialorder %v685, 0.0
      %vm702 = vcmp.ge.f32.partialorder %v686, 0.0
      %vm703 = vcmp.ge.f32.partialorder %v687, 0.0
      %vm704 = vcmp.ge.f32.partialorder %v688, 0.0
      %vm705 = vcmp.ge.f32.partialorder %v689, 0.0
      %vm706 = vcmp.ge.f32.partialorder %v690, 0.0
      %vm707 = vcmp.ge.f32.partialorder %v691, 0.0
      %vm708 = vcmp.ge.f32.partialorder %v692, 0.0
      %vm709 = vcmp.ge.f32.partialorder %v693, 0.0
      %vm710 = vcmp.ge.f32.partialorder %v694, 0.0
      %vm711 = vcmp.ge.f32.partialorder %v695, 0.0
      %vm712 = vcmp.ge.f32.partialorder %v696, 0.0
      %vm713 = vcmp.ge.f32.partialorder %v697, 0.0
      %vm714 = vcmp.ge.f32.partialorder %v698, 0.0
      %vm715 = vcmp.ge.f32.partialorder %v699, 0.0
      %v716 = vmul.f32 %v684, 0.2
      %v717 = vmul.f32 %v685, 0.2
      %v718 = vmul.f32 %v686, 0.2
      %v719 = vmul.f32 %v687, 0.2
      %v720 = vmul.f32 %v688, 0.2
      %v721 = vmul.f32 %v689, 0.2
      %v722 = vmul.f32 %v690, 0.2
      %v723 = vmul.f32 %v691, 0.2
      %v724 = vmul.f32 %v692, 0.2
      %v725 = vmul.f32 %v693, 0.2
      %v726 = vmul.f32 %v694, 0.2
      %v727 = vmul.f32 %v695, 0.2
      %v728 = vmul.f32 %v696, 0.2
      %v729 = vmul.f32 %v697, 0.2
      %v730 = vmul.f32 %v698, 0.2
      %v731 = vmul.f32 %v699, 0.2
      %v732 = vsel %vm700, %v684, %v716
      %v733 = vsel %vm701, %v685, %v717
      %v734 = vsel %vm702, %v686, %v718
      %v735 = vsel %vm703, %v687, %v719
      %v736 = vsel %vm704, %v688, %v720
      %v737 = vsel %vm705, %v689, %v721
      %v738 = vsel %vm706, %v690, %v722
      %v739 = vsel %vm707, %v691, %v723
      %v740 = vsel %vm708, %v692, %v724
      %v741 = vsel %vm709, %v693, %v725
      %v742 = vsel %vm710, %v694, %v726
      %v743 = vsel %vm711, %v695, %v727
      %v744 = vsel %vm712, %v696, %v728
      %v745 = vsel %vm713, %v697, %v729
      %v746 = vsel %vm714, %v698, %v730
      %v747 = vsel %vm715, %v699, %v731
      %v748 = vld [vmem:[%s3] sm:$0xff]
      %v749 = vld [vmem:[%s3 + $0x8] sm:$0xff]
      %v750 = vld [vmem:[%s3 + $0x10] sm:$0xff]
      %v751 = vld [vmem:[%s3 + $0x18] sm:$0xff]
      %v752 = vld [vmem:[%s3 + $0x20] sm:$0xff]
      %v753 = vld [vmem:[%s3 + $0x28] sm:$0xff]
      %v754 = vld [vmem:[%s3 + $0x30] sm:$0xff]
      %v755 = vld [vmem:[%s3 + $0x38] sm:$0xff]
      %v756 = vld [vmem:[%s3 + $0x40] sm:$0xff]
      %v757 = vld [vmem:[%s3 + $0x48] sm:$0xff]
      %v758 = vld [vmem:[%s3 + $0x50] sm:$0xff]
      %v759 = vld [vmem:[%s3 + $0x58] sm:$0xff]
      %v760 = vld [vmem:[%s3 + $0x60] sm:$0xff]
      %v761 = vld [vmem:[%s3 + $0x68] sm:$0xff]
      %v762 = vld [vmem:[%s3 + $0x70] sm:$0xff]
      %v763 = vld [vmem:[%s3 + $0x78] sm:$0xff]
      %vm764 = vcmask 523264
      %v766 = vsel %vm764, %v748, 0
      %v769 = vsel %vm764, %v749, 0
      %v772 = vsel %vm764, %v750, 0
      %v775 = vsel %vm764, %v751, 0
      %v778 = vsel %vm764, %v752, 0
      %v781 = vsel %vm764, %v753, 0
      %v784 = vsel %vm764, %v754, 0
      %v787 = vsel %vm764, %v755, 0
      %v790 = vsel %vm764, %v756, 0
      %v793 = vsel %vm764, %v757, 0
      %v796 = vsel %vm764, %v758, 0
      %v799 = vsel %vm764, %v759, 0
      %v802 = vsel %vm764, %v760, 0
      %v805 = vsel %vm764, %v761, 0
      %v808 = vsel %vm764, %v762, 0
      %v811 = vsel %vm764, %v763, 0
      %813 = vmatprep.subr.mxu0 %v733
      %814 = vmatpush1.msra.mxu0 %v732
      %815 = vmatprep.subr.mxu0 %v735
      %816 = vmatpush1.msra.mxu0 %v734
      %817 = vmatprep.subr.mxu0 %v737
      %818 = vmatpush1.msra.mxu0 %v736
      %819 = vmatprep.subr.mxu0 %v739
      %820 = vmatpush1.msra.mxu0 %v738
      %821 = vmatprep.subr.mxu0 %v741
      %822 = vmatpush1.msra.mxu0 %v740
      %823 = vmatprep.subr.mxu0 %v743
      %824 = vmatpush1.msra.mxu0 %v742
      %825 = vmatprep.subr.mxu0 %v745
      %826 = vmatpush1.msra.mxu0 %v744
      %827 = vmatprep.subr.mxu0 %v747
      %828 = vmatpush1.msra.mxu0 %v746
      %829 = vmatprep.subr.mxu0 0.0
      %830 = vmatpush1.msra.mxu0 0.0
      %831 = vmatprep.subr.mxu0 0.0
      %832 = vmatpush1.msra.mxu0 0.0
      %833 = vmatprep.subr.mxu0 0.0
      %834 = vmatpush1.msra.mxu0 0.0
      %835 = vmatprep.subr.mxu0 0.0
      %836 = vmatpush1.msra.mxu0 0.0
      %837 = vmatprep.subr.mxu0 0.0
      %838 = vmatpush1.msra.mxu0 0.0
      %839 = vmatprep.subr.mxu0 0.0
      %840 = vmatpush1.msra.mxu0 0.0
      %841 = vmatprep.subr.mxu0 0.0
      %842 = vmatpush1.msra.mxu0 0.0
      %843 = vmatprep.subr.mxu0 0.0
      %844 = vmatpush1.msra.mxu0 0.0
      %845 = vmatprep.subr.mxu0 0.0
      %846 = vmatpush1.msra.mxu0 0.0
      %847 = vmatprep.subr.mxu0 0.0
      %848 = vmatpush1.msra.mxu0 0.0
      %849 = vmatprep.subr.mxu0 0.0
      %850 = vmatpush1.msra.mxu0 0.0
      %851 = vmatprep.subr.mxu0 0.0
      %852 = vmatpush1.msra.mxu0 0.0
      %853 = vmatprep.subr.mxu0 0.0
      %854 = vmatpush1.msra.mxu0 0.0
      %855 = vmatprep.subr.mxu0 0.0
      %856 = vmatpush1.msra.mxu0 0.0
      %857 = vmatprep.subr.mxu0 0.0
      %858 = vmatpush1.msra.mxu0 0.0
      %859 = vmatprep.subr.mxu0 0.0
      %860 = vmatpush1.msra.mxu0 0.0
      %861 = vmatprep.subr.mxu0 0.0
      %862 = vmatpush1.msra.mxu0 0.0
      %863 = vmatprep.subr.mxu0 0.0
      %864 = vmatpush1.msra.mxu0 0.0
      %865 = vmatprep.subr.mxu0 0.0
      %866 = vmatpush1.msra.mxu0 0.0
      %867 = vmatprep.subr.mxu0 0.0
      %868 = vmatpush1.msra.mxu0 0.0
      %869 = vmatprep.subr.mxu0 0.0
      %870 = vmatpush1.msra.mxu0 0.0
      %871 = vmatprep.subr.mxu0 0.0
      %872 = vmatpush1.msra.mxu0 0.0
      %873 = vmatprep.subr.mxu0 0.0
      %874 = vmatpush1.msra.mxu0 0.0
      %875 = vmatprep.subr.mxu0 0.0
      %876 = vmatpush1.msra.mxu0 0.0
      %877 = vmatprep.mubr.f32.mxu0 0.0
      %878 = vmatmul.mubr.f32.gmra.mrb[0].mxu0 %v766
      %v879 = vpop.f32.mrb[0].mxu0
      %v880 = vadd.f32 0.0, %v879
      %v881 = vpop.f32.mrb[0].mxu0
      %v882 = vadd.f32 0.0, %v881
      %883 = vmatprep.mubr.f32.mxu0 0.0
      %884 = vmatmul.mubr.f32.gmra.mrb[0].mxu0 %v769
      %v885 = vpop.f32.mrb[0].mxu0
      %v886 = vadd.f32 0.0, %v885
      %v887 = vpop.f32.mrb[0].mxu0
      %v888 = vadd.f32 0.0, %v887
      %889 = vmatprep.mubr.f32.mxu0 0.0
      %890 = vmatmul.mubr.f32.gmra.mrb[0].mxu0 %v772
      %v891 = vpop.f32.mrb[0].mxu0
      %v892 = vadd.f32 0.0, %v891
      %v893 = vpop.f32.mrb[0].mxu0
      %v894 = vadd.f32 0.0, %v893
      %895 = vmatprep.mubr.f32.mxu0 0.0
      %896 = vmatmul.mubr.f32.gmra.mrb[0].mxu0 %v775
      %v897 = vpop.f32.mrb[0].mxu0
      %v898 = vadd.f32 0.0, %v897
      %v899 = vpop.f32.mrb[0].mxu0
      %v900 = vadd.f32 0.0, %v899
      %901 = vmatprep.mubr.f32.mxu0 0.0
      %902 = vmatmul.mubr.f32.gmra.mrb[0].mxu0 %v778
      %v903 = vpop.f32.mrb[0].mxu0
      %v904 = vadd.f32 0.0, %v903
      %v905 = vpop.f32.mrb[0].mxu0
      %v906 = vadd.f32 0.0, %v905
      %907 = vmatprep.mubr.f32.mxu0 0.0
      %908 = vmatmul.mubr.f32.gmra.mrb[0].mxu0 %v781
      %v909 = vpop.f32.mrb[0].mxu0
      %v910 = vadd.f32 0.0, %v909
      %v911 = vpop.f32.mrb[0].mxu0
      %v912 = vadd.f32 0.0, %v911
      %913 = vmatprep.mubr.f32.mxu0 0.0
      %914 = vmatmul.mubr.f32.gmra.mrb[0].mxu0 %v784
      %v915 = vpop.f32.mrb[0].mxu0
      %v916 = vadd.f32 0.0, %v915
      %v917 = vpop.f32.mrb[0].mxu0
      %v918 = vadd.f32 0.0, %v917
      %919 = vmatprep.mubr.f32.mxu0 0.0
      %920 = vmatmul.mubr.f32.gmra.mrb[0].mxu0 %v787
      %v921 = vpop.f32.mrb[0].mxu0
      %v922 = vadd.f32 0.0, %v921
      %v923 = vpop.f32.mrb[0].mxu0
      %v924 = vadd.f32 0.0, %v923
      %925 = vmatprep.mubr.f32.mxu0 0.0
      %926 = vmatmul.mubr.f32.gmra.mrb[0].mxu0 %v790
      %v927 = vpop.f32.mrb[0].mxu0
      %v928 = vadd.f32 0.0, %v927
      %v929 = vpop.f32.mrb[0].mxu0
      %v930 = vadd.f32 0.0, %v929
      %931 = vmatprep.mubr.f32.mxu0 0.0
      %932 = vmatmul.mubr.f32.gmra.mrb[0].mxu0 %v793
      %v933 = vpop.f32.mrb[0].mxu0
      %v934 = vadd.f32 0.0, %v933
      %v935 = vpop.f32.mrb[0].mxu0
      %v936 = vadd.f32 0.0, %v935
      %937 = vmatprep.mubr.f32.mxu0 0.0
      %938 = vmatmul.mubr.f32.gmra.mrb[0].mxu0 %v796
      %v939 = vpop.f32.mrb[0].mxu0
      %v940 = vadd.f32 0.0, %v939
      %v941 = vpop.f32.mrb[0].mxu0
      %v942 = vadd.f32 0.0, %v941
      %943 = vmatprep.mubr.f32.mxu0 0.0
      %944 = vmatmul.mubr.f32.gmra.mrb[0].mxu0 %v799
      %v945 = vpop.f32.mrb[0].mxu0
      %v946 = vadd.f32 0.0, %v945
      %v947 = vpop.f32.mrb[0].mxu0
      %v948 = vadd.f32 0.0, %v947
      %949 = vmatprep.mubr.f32.mxu0 0.0
      %950 = vmatmul.mubr.f32.gmra.mrb[0].mxu0 %v802
      %v951 = vpop.f32.mrb[0].mxu0
      %v952 = vadd.f32 0.0, %v951
      %v953 = vpop.f32.mrb[0].mxu0
      %v954 = vadd.f32 0.0, %v953
      %955 = vmatprep.mubr.f32.mxu0 0.0
      %956 = vmatmul.mubr.f32.gmra.mrb[0].mxu0 %v805
      %v957 = vpop.f32.mrb[0].mxu0
      %v958 = vadd.f32 0.0, %v957
      %v959 = vpop.f32.mrb[0].mxu0
      %v960 = vadd.f32 0.0, %v959
      %961 = vmatprep.mubr.f32.mxu0 0.0
      %962 = vmatmul.mubr.f32.gmra.mrb[0].mxu0 %v808
      %v963 = vpop.f32.mrb[0].mxu0
      %v964 = vadd.f32 0.0, %v963
      %v965 = vpop.f32.mrb[0].mxu0
      %v966 = vadd.f32 0.0, %v965
      %967 = vmatprep.mubr.f32.mxu0 0.0
      %968 = vmatmul.mubr.f32.gmra.mrb[0].mxu0 %v811
      %v969 = vpop.f32.mrb[0].mxu0
      %v970 = vadd.f32 0.0, %v969
      %v971 = vpop.f32.mrb[0].mxu0
      %v972 = vadd.f32 0.0, %v971
      %973 = vdwg.mxu0
      %v974 = vld [vmem:[%s4] sm:$0xff]
      %v975 = vld [vmem:[%s4 + $0x8] sm:$0xff]
      %v976 = vld [vmem:[%s4 + $0x10] sm:$0xff]
      %v977 = vld [vmem:[%s4 + $0x18] sm:$0xff]
      %v978 = vld [vmem:[%s4 + $0x20] sm:$0xff]
      %v979 = vld [vmem:[%s4 + $0x28] sm:$0xff]
      %v980 = vld [vmem:[%s4 + $0x30] sm:$0xff]
      %v981 = vld [vmem:[%s4 + $0x38] sm:$0xff]
      %v982 = vld [vmem:[%s4 + $0x40] sm:$0xff]
      %v983 = vld [vmem:[%s4 + $0x48] sm:$0xff]
      %v984 = vld [vmem:[%s4 + $0x50] sm:$0xff]
      %v985 = vld [vmem:[%s4 + $0x58] sm:$0xff]
      %v986 = vld [vmem:[%s4 + $0x60] sm:$0xff]
      %v987 = vld [vmem:[%s4 + $0x68] sm:$0xff]
      %v988 = vld [vmem:[%s4 + $0x70] sm:$0xff]
      %v989 = vld [vmem:[%s4 + $0x78] sm:$0xff]
      %v990 = vld [vmem:[%s4 + $0x80] sm:$0xff]
      %v991 = vld [vmem:[%s4 + $0x88] sm:$0xff]
      %v992 = vld [vmem:[%s4 + $0x90] sm:$0xff]
      %v993 = vld [vmem:[%s4 + $0x98] sm:$0xff]
      %v994 = vld [vmem:[%s4 + $0xa0] sm:$0xff]
      %v995 = vld [vmem:[%s4 + $0xa8] sm:$0xff]
      %v996 = vld [vmem:[%s4 + $0xb0] sm:$0xff]
      %v997 = vld [vmem:[%s4 + $0xb8] sm:$0xff]
      %v998 = vld [vmem:[%s4 + $0xc0] sm:$0xff]
      %v999 = vld [vmem:[%s4 + $0xc8] sm:$0xff]
      %v1000 = vld [vmem:[%s4 + $0xd0] sm:$0xff]
      %v1001 = vld [vmem:[%s4 + $0xd8] sm:$0xff]
      %v1002 = vld [vmem:[%s4 + $0xe0] sm:$0xff]
      %v1003 = vld [vmem:[%s4 + $0xe8] sm:$0xff]
      %v1004 = vld [vmem:[%s4 + $0xf0] sm:$0xff]
      %v1005 = vld [vmem:[%s4 + $0xf8] sm:$0xff]
      %v1006 = vadd.f32 %v974, %v880
      %v1007 = vadd.f32 %v975, %v882
      %v1008 = vadd.f32 %v976, %v886
      %v1009 = vadd.f32 %v977, %v888
      %v1010 = vadd.f32 %v978, %v892
      %v1011 = vadd.f32 %v979, %v894
      %v1012 = vadd.f32 %v980, %v898
      %v1013 = vadd.f32 %v981, %v900
      %v1014 = vadd.f32 %v982, %v904
      %v1015 = vadd.f32 %v983, %v906
      %v1016 = vadd.f32 %v984, %v910
      %v1017 = vadd.f32 %v985, %v912
      %v1018 = vadd.f32 %v986, %v916
      %v1019 = vadd.f32 %v987, %v918
      %v1020 = vadd.f32 %v988, %v922
      %v1021 = vadd.f32 %v989, %v924
      %v1022 = vadd.f32 %v990, %v928
      %v1023 = vadd.f32 %v991, %v930
      %v1024 = vadd.f32 %v992, %v934
      %v1025 = vadd.f32 %v993, %v936
      %v1026 = vadd.f32 %v994, %v940
      %v1027 = vadd.f32 %v995, %v942
      %v1028 = vadd.f32 %v996, %v946
      %v1029 = vadd.f32 %v997, %v948
      %v1030 = vadd.f32 %v998, %v952
      %v1031 = vadd.f32 %v999, %v954
      %v1032 = vadd.f32 %v1000, %v958
      %v1033 = vadd.f32 %v1001, %v960
      %v1034 = vadd.f32 %v1002, %v964
      %v1035 = vadd.f32 %v1003, %v966
      %v1036 = vadd.f32 %v1004, %v970
      %v1037 = vadd.f32 %v1005, %v972
      %1038 = vst [vmem:[%s4] sm:$0xff] %v1006
      %1039 = vst [vmem:[%s4 + $0x8] sm:$0xff] %v1007
      %1040 = vst [vmem:[%s4 + $0x10] sm:$0xff] %v1008
      %1041 = vst [vmem:[%s4 + $0x18] sm:$0xff] %v1009
      %1042 = vst [vmem:[%s4 + $0x20] sm:$0xff] %v1010
      %1043 = vst [vmem:[%s4 + $0x28] sm:$0xff] %v1011
      %1044 = vst [vmem:[%s4 + $0x30] sm:$0xff] %v1012
      %1045 = vst [vmem:[%s4 + $0x38] sm:$0xff] %v1013
      %1046 = vst [vmem:[%s4 + $0x40] sm:$0xff] %v1014
      %1047 = vst [vmem:[%s4 + $0x48] sm:$0xff] %v1015
      %1048 = vst [vmem:[%s4 + $0x50] sm:$0xff] %v1016
      %1049 = vst [vmem:[%s4 + $0x58] sm:$0xff] %v1017
      %1050 = vst [vmem:[%s4 + $0x60] sm:$0xff] %v1018
      %1051 = vst [vmem:[%s4 + $0x68] sm:$0xff] %v1019
      %1052 = vst [vmem:[%s4 + $0x70] sm:$0xff] %v1020
      %1053 = vst [vmem:[%s4 + $0x78] sm:$0xff] %v1021
      %1054 = vst [vmem:[%s4 + $0x80] sm:$0xff] %v1022
      %1055 = vst [vmem:[%s4 + $0x88] sm:$0xff] %v1023
      %1056 = vst [vmem:[%s4 + $0x90] sm:$0xff] %v1024
      %1057 = vst [vmem:[%s4 + $0x98] sm:$0xff] %v1025
      %1058 = vst [vmem:[%s4 + $0xa0] sm:$0xff] %v1026
      %1059 = vst [vmem:[%s4 + $0xa8] sm:$0xff] %v1027
      %1060 = vst [vmem:[%s4 + $0xb0] sm:$0xff] %v1028
      %1061 = vst [vmem:[%s4 + $0xb8] sm:$0xff] %v1029
      %1062 = vst [vmem:[%s4 + $0xc0] sm:$0xff] %v1030
      %1063 = vst [vmem:[%s4 + $0xc8] sm:$0xff] %v1031
      %1064 = vst [vmem:[%s4 + $0xd0] sm:$0xff] %v1032
      %1065 = vst [vmem:[%s4 + $0xd8] sm:$0xff] %v1033
      %1066 = vst [vmem:[%s4 + $0xe0] sm:$0xff] %v1034
      %1067 = vst [vmem:[%s4 + $0xe8] sm:$0xff] %v1035
      %1068 = vst [vmem:[%s4 + $0xf0] sm:$0xff] %v1036
      %1069 = vst [vmem:[%s4 + $0xf8] sm:$0xff] %v1037
      %v1070 = vld [vmem:[%s5] sm:$0xff]
      %v1071 = vld [vmem:[%s5 + $0x8] sm:$0xff]
      %v1072 = vld [vmem:[%s5 + $0x10] sm:$0xff]
      %v1073 = vld [vmem:[%s5 + $0x18] sm:$0xff]
      %v1074 = vld [vmem:[%s5 + $0x20] sm:$0xff]
      %v1075 = vld [vmem:[%s5 + $0x28] sm:$0xff]
      %v1076 = vld [vmem:[%s5 + $0x30] sm:$0xff]
      %v1077 = vld [vmem:[%s5 + $0x38] sm:$0xff]
      %v1078 = vld [vmem:[%s5 + $0x40] sm:$0xff]
      %v1079 = vld [vmem:[%s5 + $0x48] sm:$0xff]
      %v1080 = vld [vmem:[%s5 + $0x50] sm:$0xff]
      %v1081 = vld [vmem:[%s5 + $0x58] sm:$0xff]
      %v1082 = vld [vmem:[%s5 + $0x60] sm:$0xff]
      %v1083 = vld [vmem:[%s5 + $0x68] sm:$0xff]
      %v1084 = vld [vmem:[%s5 + $0x70] sm:$0xff]
      %v1085 = vld [vmem:[%s5 + $0x78] sm:$0xff]
      %v1086 = vld [vmem:[%s5 + $0x80] sm:$0xff]
      %v1087 = vld [vmem:[%s5 + $0x88] sm:$0xff]
      %v1088 = vld [vmem:[%s5 + $0x90] sm:$0xff]
      %v1089 = vld [vmem:[%s5 + $0x98] sm:$0xff]
      %v1090 = vld [vmem:[%s5 + $0xa0] sm:$0xff]
      %v1091 = vld [vmem:[%s5 + $0xa8] sm:$0xff]
      %v1092 = vld [vmem:[%s5 + $0xb0] sm:$0xff]
      %v1093 = vld [vmem:[%s5 + $0xb8] sm:$0xff]
      %v1094 = vld [vmem:[%s5 + $0xc0] sm:$0xff]
      %v1095 = vld [vmem:[%s5 + $0xc8] sm:$0xff]
      %v1096 = vld [vmem:[%s5 + $0xd0] sm:$0xff]
      %v1097 = vld [vmem:[%s5 + $0xd8] sm:$0xff]
      %v1098 = vld [vmem:[%s5 + $0xe0] sm:$0xff]
      %v1099 = vld [vmem:[%s5 + $0xe8] sm:$0xff]
      %v1100 = vld [vmem:[%s5 + $0xf0] sm:$0xff]
      %v1101 = vld [vmem:[%s5 + $0xf8] sm:$0xff]
      %v1102 = vmul.f32 %v880, %v880
      %v1103 = vmul.f32 %v882, %v882
      %v1104 = vmul.f32 %v886, %v886
      %v1105 = vmul.f32 %v888, %v888
      %v1106 = vmul.f32 %v892, %v892
      %v1107 = vmul.f32 %v894, %v894
      %v1108 = vmul.f32 %v898, %v898
      %v1109 = vmul.f32 %v900, %v900
      %v1110 = vmul.f32 %v904, %v904
      %v1111 = vmul.f32 %v906, %v906
      %v1112 = vmul.f32 %v910, %v910
      %v1113 = vmul.f32 %v912, %v912
      %v1114 = vmul.f32 %v916, %v916
      %v1115 = vmul.f32 %v918, %v918
      %v1116 = vmul.f32 %v922, %v922
      %v1117 = vmul.f32 %v924, %v924
      %v1118 = vmul.f32 %v928, %v928
      %v1119 = vmul.f32 %v930, %v930
      %v1120 = vmul.f32 %v934, %v934
      %v1121 = vmul.f32 %v936, %v936
      %v1122 = vmul.f32 %v940, %v940
      %v1123 = vmul.f32 %v942, %v942
      %v1124 = vmul.f32 %v946, %v946
      %v1125 = vmul.f32 %v948, %v948
      %v1126 = vmul.f32 %v952, %v952
      %v1127 = vmul.f32 %v954, %v954
      %v1128 = vmul.f32 %v958, %v958
      %v1129 = vmul.f32 %v960, %v960
      %v1130 = vmul.f32 %v964, %v964
      %v1131 = vmul.f32 %v966, %v966
      %v1132 = vmul.f32 %v970, %v970
      %v1133 = vmul.f32 %v972, %v972
      %v1134 = vadd.f32 %v1070, %v1102
      %v1135 = vadd.f32 %v1071, %v1103
      %v1136 = vadd.f32 %v1072, %v1104
      %v1137 = vadd.f32 %v1073, %v1105
      %v1138 = vadd.f32 %v1074, %v1106
      %v1139 = vadd.f32 %v1075, %v1107
      %v1140 = vadd.f32 %v1076, %v1108
      %v1141 = vadd.f32 %v1077, %v1109
      %v1142 = vadd.f32 %v1078, %v1110
      %v1143 = vadd.f32 %v1079, %v1111
      %v1144 = vadd.f32 %v1080, %v1112
      %v1145 = vadd.f32 %v1081, %v1113
      %v1146 = vadd.f32 %v1082, %v1114
      %v1147 = vadd.f32 %v1083, %v1115
      %v1148 = vadd.f32 %v1084, %v1116
      %v1149 = vadd.f32 %v1085, %v1117
      %v1150 = vadd.f32 %v1086, %v1118
      %v1151 = vadd.f32 %v1087, %v1119
      %v1152 = vadd.f32 %v1088, %v1120
      %v1153 = vadd.f32 %v1089, %v1121
      %v1154 = vadd.f32 %v1090, %v1122
      %v1155 = vadd.f32 %v1091, %v1123
      %v1156 = vadd.f32 %v1092, %v1124
      %v1157 = vadd.f32 %v1093, %v1125
      %v1158 = vadd.f32 %v1094, %v1126
      %v1159 = vadd.f32 %v1095, %v1127
      %v1160 = vadd.f32 %v1096, %v1128
      %v1161 = vadd.f32 %v1097, %v1129
      %v1162 = vadd.f32 %v1098, %v1130
      %v1163 = vadd.f32 %v1099, %v1131
      %v1164 = vadd.f32 %v1100, %v1132
      %v1165 = vadd.f32 %v1101, %v1133
      %1166 = vst [vmem:[%s5] sm:$0xff] %v1134
      %1167 = vst [vmem:[%s5 + $0x8] sm:$0xff] %v1135
      %1168 = vst [vmem:[%s5 + $0x10] sm:$0xff] %v1136
      %1169 = vst [vmem:[%s5 + $0x18] sm:$0xff] %v1137
      %1170 = vst [vmem:[%s5 + $0x20] sm:$0xff] %v1138
      %1171 = vst [vmem:[%s5 + $0x28] sm:$0xff] %v1139
      %1172 = vst [vmem:[%s5 + $0x30] sm:$0xff] %v1140
      %1173 = vst [vmem:[%s5 + $0x38] sm:$0xff] %v1141
      %1174 = vst [vmem:[%s5 + $0x40] sm:$0xff] %v1142
      %1175 = vst [vmem:[%s5 + $0x48] sm:$0xff] %v1143
      %1176 = vst [vmem:[%s5 + $0x50] sm:$0xff] %v1144
      %1177 = vst [vmem:[%s5 + $0x58] sm:$0xff] %v1145
      %1178 = vst [vmem:[%s5 + $0x60] sm:$0xff] %v1146
      %1179 = vst [vmem:[%s5 + $0x68] sm:$0xff] %v1147
      %1180 = vst [vmem:[%s5 + $0x70] sm:$0xff] %v1148
      %1181 = vst [vmem:[%s5 + $0x78] sm:$0xff] %v1149
      %1182 = vst [vmem:[%s5 + $0x80] sm:$0xff] %v1150
      %1183 = vst [vmem:[%s5 + $0x88] sm:$0xff] %v1151
      %1184 = vst [vmem:[%s5 + $0x90] sm:$0xff] %v1152
      %1185 = vst [vmem:[%s5 + $0x98] sm:$0xff] %v1153
      %1186 = vst [vmem:[%s5 + $0xa0] sm:$0xff] %v1154
      %1187 = vst [vmem:[%s5 + $0xa8] sm:$0xff] %v1155
      %1188 = vst [vmem:[%s5 + $0xb0] sm:$0xff] %v1156
      %1189 = vst [vmem:[%s5 + $0xb8] sm:$0xff] %v1157
      %1190 = vst [vmem:[%s5 + $0xc0] sm:$0xff] %v1158
      %1191 = vst [vmem:[%s5 + $0xc8] sm:$0xff] %v1159
      %1192 = vst [vmem:[%s5 + $0xd0] sm:$0xff] %v1160
      %1193 = vst [vmem:[%s5 + $0xd8] sm:$0xff] %v1161
      %1194 = vst [vmem:[%s5 + $0xe0] sm:$0xff] %v1162
      %1195 = vst [vmem:[%s5 + $0xe8] sm:$0xff] %v1163
      %1196 = vst [vmem:[%s5 + $0xf0] sm:$0xff] %v1164
      %1197 = vst [vmem:[%s5 + $0xf8] sm:$0xff] %v1165
      // Predicated region
      $region41: #{pixel_discriminator.2} parent=35 // pred_check
        %p1198 = pneg %p133
      $region42: #{pixel_discriminator.2} parent=35 // pred_check_branch
        %1200 = sbr.rel (%p1198) target = $region44
      $region43: #{pixel_discriminator.2} parent=35 // pred_region
        _
      $region44: #{pixel_discriminator.2} parent=35 // pred_fallthru
        _
      // Predicated region
      $region45: #{pixel_discriminator.2} parent=35 // pred_check
        %p1201 = pneg %p154
      $region46: #{pixel_discriminator.2} parent=35 // pred_check_branch
        %1203 = sbr.rel (%p1201) target = $region48
      $region47: #{pixel_discriminator.2} parent=35 // pred_region
        _
      $region48: #{pixel_discriminator.2} parent=35 // pred_fallthru
        _
      // Predicated region
      $region49: #{pixel_discriminator.2} parent=35 // pred_check
        %p1204 = pneg %p133
      $region50: #{pixel_discriminator.2} parent=35 // pred_check_branch
        %1206 = sbr.rel (%p1204) target = $region52
      $region51: #{pixel_discriminator.2} parent=35 // pred_region
        _
      $region52: #{pixel_discriminator.2} parent=35 // pred_fallthru
        _
      // Predicated region
      $region53: #{pixel_discriminator.2} parent=35 // pred_check
        %p1207 = pneg %p154
      $region54: #{pixel_discriminator.2} parent=35 // pred_check_branch
        %1209 = sbr.rel (%p1207) target = $region56
      $region55: #{pixel_discriminator.2} parent=35 // pred_region
        _
      $region56: #{pixel_discriminator.2} parent=35 // pred_fallthru
        _
    $region36: #{pixel_discriminator.2} parent=5 // pred_fallthru
      _
    %p1210 = scmp.le.s32.totalorder 2, %s12
    // Predicated region
    $region57: #{pixel_discriminator.2} parent=5 // pred_check
      %p1211 = pneg %p1210
    $region58: #{pixel_discriminator.2} parent=5 // pred_check_branch
      %1213 = sbr.rel (%p1211) target = $region60
    $region59: #{pixel_discriminator.2} parent=5 // pred_region
      %s1214 = ssub.s32 %s12, 2
    $region60: #{pixel_discriminator.2} parent=5 // pred_fallthru
      _
  $region6: #{pixel_discriminator.2} parent=0 // loop_footer
    %s16 = sadd.s32 1, %s12
  $region7: #{pixel_discriminator.2} parent=0 // loop_footer_branch
    %11 = sbr.rel target = $region3
  $region8: #{pixel_discriminator.2} parent=0 // loop_exit
    _

</llo_original>
